<compile_context>
chip_gen: v7x
topology: tpu7x:2x2x1
jax: 0.10.0
libtpu: 0.0.40
codegen_flags: <defaults>
</compile_context>

<pallas_src>
import functools

import jax
import jax.numpy as jnp
from jax.experimental import pallas as pl
from jax.experimental.pallas import tpu as pltpu


def _round_up(x, m):
    return ((x + m - 1) // m) * m


def _mlp_kernel(x_ref, w1_ref, b1_ref, w2_ref, b2_ref, o_ref, acc_ref):
    """One (batch-tile, H-chunk) step of the fused 2-layer MLP head.

    grid = (batch tiles, H chunks). The H axis is the inner ("arbitrary")
    reduction axis so per-chunk weight DMA streams under compute.
    """
    h_idx = pl.program_id(1)

    @pl.when(h_idx == 0)
    def _():
        acc_ref[...] = jnp.zeros_like(acc_ref)

    # Cast activations on the VPU inside the kernel (hides under the DMA of
    # the next weight chunk) instead of a separate XLA cast pass over HBM.
    x = x_ref[...].astype(jnp.bfloat16)                                  # (TB, D)
    h = jnp.dot(x, w1_ref[...], preferred_element_type=jnp.float32)     # (TB, TH) f32
    # Dropout(p=0.2) in eval mode == identity (both occurrences).
    h = jnp.maximum(h + b1_ref[...], 0.0)                               # bias + ReLU, f32
    acc_ref[...] += jnp.dot(h.astype(jnp.bfloat16), w2_ref[...],
                            preferred_element_type=jnp.float32)         # (TB, Cp) f32

    @pl.when(h_idx == pl.num_programs(1) - 1)
    def _():
        o_ref[...] = (acc_ref[...] + b2_ref[...]).astype(o_ref.dtype)


def prepare_params(w1, b1, w2, b2):
    """One-time weight preparation (call at model init, NOT per forward):
    cast matmul weights to bf16 and lane-pad the classifier dim to 128.

    w1: [D, H], b1: [1, H], w2: [H, C], b2: [1, C]  (weights stored [in, out],
    i.e. transposed vs. PyTorch nn.Linear's [out, in]).
    """
    C = w2.shape[1]
    C_pad = max(128, _round_up(C, 128))
    if C_pad != C:
        w2 = jnp.pad(w2, ((0, 0), (0, C_pad - C)))
        b2 = jnp.pad(b2, ((0, 0), (0, C_pad - C)))
    return (w1.astype(jnp.bfloat16),
            b1.astype(jnp.float32),
            w2.astype(jnp.bfloat16),
            b2.astype(jnp.float32))


def descriptive_task_head(features, w1, b1, w2, b2, *, n_classes,
                          max_tile_b=256, tile_h=256):
    """features: [B, D] (f32/bf16); params from `prepare_params` (bf16/f32,
    C already lane-padded). Returns logits [B, n_classes] in features.dtype.
    """
    B, D = features.shape
    H = w1.shape[1]
    C_pad = w2.shape[1]
    if H % tile_h != 0:
        tile_h = H

    # --- batch tiling: avoid a full-HBM pad of the activations when possible
    if B <= max_tile_b:
        tile_b = max(16, _round_up(B, 16))         # bf16 sublane packing
        B_pad = tile_b
    else:
        tile_b = None
        for cand in range((max_tile_b // 16) * 16, 127, -16):
            if B % cand == 0:
                tile_b = cand
                break
        if tile_b is None:                         # ragged batch: pad (rare)
            tile_b = max_tile_b
            B_pad = _round_up(B, tile_b)
        else:
            B_pad = B
    if B_pad != B:
        features = jnp.pad(features, ((0, B_pad - B), (0, 0)))

    out_dtype = features.dtype
    n_btiles = B_pad // tile_b
    n_htiles = H // tile_h
    grid = (n_btiles, n_htiles)

    # --- tight VMEM budget: double-buffered blocks + f32 accumulator ---------
    x_bytes = tile_b * D * jnp.dtype(features.dtype).itemsize
    w1_bytes = D * tile_h * 2
    w2_bytes = tile_h * C_pad * 2
    bias_bytes = 8 * (tile_h + C_pad) * 4
    out_bytes = tile_b * C_pad * jnp.dtype(out_dtype).itemsize
    acc_bytes = tile_b * C_pad * 4
    footprint = 2 * (x_bytes + w1_bytes + w2_bytes + bias_bytes + out_bytes) + acc_bytes
    vmem_limit = min(64 * 1024 * 1024,
                     max(16 * 1024 * 1024, _round_up(2 * footprint, 1 << 20)))

    cost = pl.CostEstimate(
        flops=2 * B_pad * (D * H + H * C_pad),
        transcendentals=0,
        bytes_accessed=(B_pad * D * jnp.dtype(features.dtype).itemsize
                        + n_btiles * (D * H * 2 + H * C_pad * 2)
                        + (H + C_pad) * 4
                        + B_pad * C_pad * jnp.dtype(out_dtype).itemsize),
    )

    out = pl.pallas_call(
        _mlp_kernel,
        out_shape=jax.ShapeDtypeStruct((B_pad, C_pad), out_dtype),
        grid_spec=pltpu.PrefetchScalarGridSpec(
            num_scalar_prefetch=0,
            grid=grid,
            in_specs=[
                pl.BlockSpec((tile_b, D), lambda i, h: (i, 0)),      # x tile (same over h)
                pl.BlockSpec((D, tile_h), lambda i, h: (0, h)),      # W1 chunk (streams)
                pl.BlockSpec((1, tile_h), lambda i, h: (0, h)),      # b1 chunk
                pl.BlockSpec((tile_h, C_pad), lambda i, h: (h, 0)),  # W2 chunk (streams)
                pl.BlockSpec((1, C_pad), lambda i, h: (0, 0)),       # b2 (resident)
            ],
            out_specs=pl.BlockSpec((tile_b, C_pad), lambda i, h: (i, 0)),
            scratch_shapes=[pltpu.VMEM((tile_b, C_pad), jnp.float32)],
        ),
        compiler_params=pltpu.CompilerParams(
            dimension_semantics=("parallel", "arbitrary"),
            vmem_limit_bytes=vmem_limit,
        ),
        cost_estimate=cost,
    )(features, w1, b1, w2, b2)

    # Slice padded batch rows and padded logit columns back off.
    return out[:B, :n_classes]


def reference_forward(features, w1, b1, w2, b2):
    # Same precision path as the kernel: bf16 matmul inputs, f32 accumulate.
    xb = features.astype(jnp.bfloat16)
    h = jnp.dot(xb, w1.astype(jnp.bfloat16),
                preferred_element_type=jnp.float32) + b1
    h = jnp.maximum(h, 0.0)
    o = jnp.dot(h.astype(jnp.bfloat16), w2.astype(jnp.bfloat16),
                preferred_element_type=jnp.float32) + b2
    return o.astype(features.dtype)


if __name__ == "__main__":
    # Shapes from the module: Linear(768*2 -> 1024) -> ... -> Linear(1024 -> 21)
    B, D, H, C = 16, 768 * 2, 1024, 21

    key = jax.random.PRNGKey(0)
    kx, kw1, kb1, kw2, kb2 = jax.random.split(key, 5)

    features = jax.random.normal(kx, (B, D), dtype=jnp.float32)
    # Deterministic synthetic parameters (nn.Linear-like scale), stored [in, out].
    w1 = jax.random.normal(kw1, (D, H), dtype=jnp.float32) * (1.0 / D ** 0.5)
    b1 = jax.random.normal(kb1, (1, H), dtype=jnp.float32) * 0.01
    w2 = jax.random.normal(kw2, (H, C), dtype=jnp.float32) * (1.0 / H ** 0.5)
    b2 = jax.random.normal(kb2, (1, C), dtype=jnp.float32) * 0.01

    # One-time prep (model init): bf16 cast + lane-pad C to 128.
    w1p, b1p, w2p, b2p = jax.tree.map(jax.block_until_ready,
                                      prepare_params(w1, b1, w2, b2))

    run = jax.jit(functools.partial(descriptive_task_head, n_classes=C,
                                    max_tile_b=256, tile_h=256))
    out = jax.block_until_ready(run(features, w1p, b1p, w2p, b2p))

    ref = reference_forward(features, w1, b1, w2, b2)
    assert out.shape == (B, C), f"bad shape {out.shape}"
    assert jnp.allclose(out, ref, atol=2e-2, rtol=2e-2), "mismatch vs reference"

    print("KERNEL_OK")
</pallas_src>

<mosaic_0001>
module attributes {stable_mosaic.version = 11 : i64} {
  func.func @_mlp_kernel(%arg0: i32, %arg1: i32, %arg2: memref<16x1536xf32, #tpu.memory_space<vmem>>, %arg3: memref<1536x256xbf16, #tpu.memory_space<vmem>>, %arg4: memref<1x256xf32, #tpu.memory_space<vmem>>, %arg5: memref<256x128xbf16, #tpu.memory_space<vmem>>, %arg6: memref<1x128xf32, #tpu.memory_space<vmem>>, %arg7: memref<16x128xf32, #tpu.memory_space<vmem>>, %arg8: memref<16x128xf32, #tpu.memory_space<vmem>>) attributes {dimension_semantics = [#tpu.dimension_semantics<parallel>, #tpu.dimension_semantics<arbitrary>], iteration_bounds = array<i64: 1, 4>, scalar_prefetch = 0 : i64, scratch_operands = 1 : i64, tpu.core_type = #tpu.core_type<tc>, window_params = [{transform_indices = @transform_0, window_bounds = array<i64: 16, 1536>}, {transform_indices = @transform_1, window_bounds = array<i64: 1536, 256>}, {transform_indices = @transform_2, window_bounds = array<i64: 1, 256>}, {transform_indices = @transform_3, window_bounds = array<i64: 256, 128>}, {pipeline_mode = #tpu.pipeline_mode<synchronous>, transform_indices = @transform_4, window_bounds = array<i64: 1, 128>}, {transform_indices = @transform_5, window_bounds = array<i64: 16, 128>}]} {
    %c0_i32 = arith.constant 0 : i32
    %0 = arith.cmpi eq, %arg1, %c0_i32 : i32
    %1 = arith.extui %0 : i1 to i32
    %c0_i32_0 = arith.constant 0 : i32
    %2 = arith.cmpi ne, %1, %c0_i32_0 : i32
    scf.if %2 {
      %cst_15 = arith.constant 0.000000e+00 : f32
      %21 = vector.broadcast %cst_15 : f32 to vector<16x128xf32>
      %c0_16 = arith.constant 0 : index
      %c0_17 = arith.constant 0 : index
      %22 = vector.load %arg8[%c0_16, %c0_17] : memref<16x128xf32, #tpu.memory_space<vmem>>, vector<16x128xf32>
      tpu.vector_store %arg8[%c0_16, %c0_17], %21 {strides = array<i32>} : memref<16x128xf32, #tpu.memory_space<vmem>>, vector<16x128xf32>,
    } else {
    }
    %c0 = arith.constant 0 : index
    %c0_1 = arith.constant 0 : index
    %3 = vector.load %arg2[%c0, %c0_1] : memref<16x1536xf32, #tpu.memory_space<vmem>>, vector<16x1536xf32>
    %4 = arith.truncf %3 : vector<16x1536xf32> to vector<16x1536xbf16>
    %c0_2 = arith.constant 0 : index
    %c0_3 = arith.constant 0 : index
    %5 = vector.load %arg3[%c0_2, %c0_3] : memref<1536x256xbf16, #tpu.memory_space<vmem>>, vector<1536x256xbf16>
    %cst = arith.constant dense<0.000000e+00> : vector<16x256xf32>
    %6 = tpu.matmul %4, %5, %cst {dimension_numbers = #tpu.dot_dimension_numbers<[1], [0], [0], [1], [0, 0, 1, 1], [], []>} : vector<16x1536xbf16>, vector<1536x256xbf16>, vector<16x256xf32> -> vector<16x256xf32>
    %c0_4 = arith.constant 0 : index
    %c0_5 = arith.constant 0 : index
    %7 = vector.load %arg4[%c0_4, %c0_5] : memref<1x256xf32, #tpu.memory_space<vmem>>, vector<1x256xf32>
    %8 = vector.broadcast %7 : vector<1x256xf32> to vector<16x256xf32>
    %9 = arith.addf %6, %8 : vector<16x256xf32>
    %cst_6 = arith.constant 0.000000e+00 : f32
    %10 = vector.broadcast %cst_6 : f32 to vector<16x256xf32>
    %11 = arith.maximumf %9, %10 : vector<16x256xf32>
    %c0_7 = arith.constant 0 : index
    %c0_8 = arith.constant 0 : index
    %12 = vector.load %arg8[%c0_7, %c0_8] : memref<16x128xf32, #tpu.memory_space<vmem>>, vector<16x128xf32>
    %13 = arith.truncf %11 : vector<16x256xf32> to vector<16x256xbf16>
    %c0_9 = arith.constant 0 : index
    %c0_10 = arith.constant 0 : index
    %14 = vector.load %arg5[%c0_9, %c0_10] : memref<256x128xbf16, #tpu.memory_space<vmem>>, vector<256x128xbf16>
    %cst_11 = arith.constant dense<0.000000e+00> : vector<16x128xf32>
    %15 = tpu.matmul %13, %14, %cst_11 {dimension_numbers = #tpu.dot_dimension_numbers<[1], [0], [0], [1], [0, 0, 1, 1], [], []>} : vector<16x256xbf16>, vector<256x128xbf16>, vector<16x128xf32> -> vector<16x128xf32>
    %16 = arith.addf %12, %15 : vector<16x128xf32>
    %c0_12 = arith.constant 0 : index
    %c0_13 = arith.constant 0 : index
    %17 = vector.load %arg8[%c0_12, %c0_13] : memref<16x128xf32, #tpu.memory_space<vmem>>, vector<16x128xf32>
    tpu.vector_store %arg8[%c0_12, %c0_13], %16 {strides = array<i32>} : memref<16x128xf32, #tpu.memory_space<vmem>>, vector<16x128xf32>,
    %c3_i32 = arith.constant 3 : i32
    %18 = arith.cmpi eq, %arg1, %c3_i32 : i32
    %19 = arith.extui %18 : i1 to i32
    %c0_i32_14 = arith.constant 0 : i32
    %20 = arith.cmpi ne, %19, %c0_i32_14 : i32
    scf.if %20 {
      %c0_15 = arith.constant 0 : index
      %c0_16 = arith.constant 0 : index
      %21 = vector.load %arg8[%c0_15, %c0_16] : memref<16x128xf32, #tpu.memory_space<vmem>>, vector<16x128xf32>
      %c0_17 = arith.constant 0 : index
      %c0_18 = arith.constant 0 : index
      %22 = vector.load %arg6[%c0_17, %c0_18] : memref<1x128xf32, #tpu.memory_space<vmem>>, vector<1x128xf32>
      %23 = vector.broadcast %22 : vector<1x128xf32> to vector<16x128xf32>
      %24 = arith.addf %21, %23 : vector<16x128xf32>
      %c0_19 = arith.constant 0 : index
      %c0_20 = arith.constant 0 : index
      %25 = vector.load %arg7[%c0_19, %c0_20] : memref<16x128xf32, #tpu.memory_space<vmem>>, vector<16x128xf32>
      tpu.vector_store %arg7[%c0_19, %c0_20], %24 {strides = array<i32>} : memref<16x128xf32, #tpu.memory_space<vmem>>, vector<16x128xf32>,
    } else {
    }
    return
  }
  func.func @transform_0(%arg0: i32, %arg1: i32) -> (i32, i32) {
    %c0_i32 = arith.constant 0 : i32
    %c0_i32_0 = arith.constant 0 : i32
    return %arg0, %c0_i32 : i32, i32
  }
  func.func @transform_1(%arg0: i32, %arg1: i32) -> (i32, i32) {
    %c0_i32 = arith.constant 0 : i32
    %c0_i32_0 = arith.constant 0 : i32
    return %c0_i32, %arg1 : i32, i32
  }
  func.func @transform_2(%arg0: i32, %arg1: i32) -> (i32, i32) {
    %c0_i32 = arith.constant 0 : i32
    %c0_i32_0 = arith.constant 0 : i32
    return %c0_i32, %arg1 : i32, i32
  }
  func.func @transform_3(%arg0: i32, %arg1: i32) -> (i32, i32) {
    %c0_i32 = arith.constant 0 : i32
    %c0_i32_0 = arith.constant 0 : i32
    return %arg1, %c0_i32 : i32, i32
  }
  func.func @transform_4(%arg0: i32, %arg1: i32) -> (i32, i32) {
    %c0_i32 = arith.constant 0 : i32
    %c0_i32_0 = arith.constant 0 : i32
    %c0_i32_1 = arith.constant 0 : i32
    return %c0_i32, %c0_i32_0 : i32, i32
  }
  func.func @transform_5(%arg0: i32, %arg1: i32) -> (i32, i32) {
    %c0_i32 = arith.constant 0 : i32
    %c0_i32_0 = arith.constant 0 : i32
    return %arg0, %c0_i32 : i32, i32
  }
}

</mosaic_0001>

<llo_original>
// kernel: descriptive_task_head.1
$region0: #{descriptive_task_head.1}
  #allocation0 [shape = 'u32[]', space=smem, size = 0x4, offset = 0x4, fixed_abs, tag = 'smem constant byte address 0x4 - core index']
  #allocation1 [shape = 'u32[144,128]{1,0:T(1,128)}', space=vmem, size = 0x12000, scoped, tag = 'internal scratch']
  #allocation2 [shape = 'f32[16,128]{1,0:T(8,128)}', space=vmem, size = 0x2000, scoped, tag = 'scratch operand']
  %s0 = inlined_call_operand.hbm [shape: f32[16,1536], index: 0, kind: input, shape index: {}]
  %s1 = inlined_call_operand.hbm [shape: bf16[1536,1024], index: 1, kind: input, shape index: {}]
  %s2 = inlined_call_operand.hbm [shape: f32[1,1024], index: 2, kind: input, shape index: {}]
  %s3 = inlined_call_operand.hbm [shape: bf16[1024,128], index: 3, kind: input, shape index: {}]
  %s4 = inlined_call_operand.hbm [shape: f32[1,128], index: 4, kind: input, shape index: {}]
  %s5 = inlined_call_operand.hbm [shape: f32[16,128], index: 5, kind: output, shape index: {}]
  %s6 = sld [smem:[#allocation0]]
  $region81: #{descriptive_task_head.1} parent=0
    _
  %s8 = ssub.s32 1, %s6
  %s9 = scalar_select 0, %s8, %s6
  $region1: #{descriptive_task_head.1} parent=0
    #allocation3 [shape = 'u8[98304]{0}', space=vmem, size = 0x18000, scoped, tag = 'input window, operand 0, single buffered']
    #allocation4 [shape = 's32[2]{0}', space=sflag, size = 0x8, scoped, tag = 'scoped memory for descriptive_task_head.1']
    #allocation5 [shape = 's32[2]{0}', space=sflag, size = 0x8, scoped, tag = 'scoped memory for descriptive_task_head.1']
    #allocation6 [shape = 'u8[1572864]{0}', space=vmem, size = 0x180000, scoped, tag = 'input window, operand 1']
    #allocation7 [shape = 's32[2]{0}', space=sflag, size = 0x8, scoped, tag = 'scoped memory for descriptive_task_head.1']
    #allocation8 [shape = 'u8[2048]{0}', space=vmem, size = 0x800, scoped, tag = 'input window, operand 2']
    #allocation9 [shape = 'u8[131072]{0}', space=vmem, size = 0x20000, scoped, tag = 'input window, operand 3']
    #allocation10 [shape = 's32[2]{0}', space=sflag, size = 0x8, scoped, tag = 'scoped memory for descriptive_task_head.1']
    #allocation11 [shape = 'u8[512]{0}', space=vmem, size = 0x400, scoped, tag = 'input window, operand 4, single buffered']
    #allocation12 [shape = 'u8[8192]{0}', space=vmem, size = 0x2000, scoped, tag = 'output window, operand 0, single buffered']
    %10 = vsyncpa [#allocation4], 0
    %11 = vsyncpa [#allocation7], 0
    %s12 = scalar_lea.sflag [#allocation7], 1
    %13 = vsyncpa %s12, 0
    %14 = vsyncpa [#allocation10], 0
    %s15 = scalar_lea.sflag [#allocation10], 1
    %16 = vsyncpa %s15, 0
    %17 = vsyncpa [#allocation5], 0
    loop: start=0, step=1, limit=6
    $region2: #{descriptive_task_head.1} parent=1 // loop_pre_header
      _
    $region3: #{descriptive_task_head.1} parent=1 // loop_header
      %s19 = sphi 0, %s23
      %p20 = scmp.ge.s32.totalorder %s19, 6
      %s26 = sphi 0, %s38
      %s27 = sphi 0, %s34
      %s28 = sphi 0, %s26
      %s29 = sphi 0, %s27
      %s30 = sphi 0, %s28
      %s31 = sphi 0, %s29
      %s41 = sphi 0, %s43
      %s44 = sphi 0, %s41
      %s45 = sphi 0, %s44
      %s61 = sphi 0, %s45
      %s67 = sphi 0, %s69
      %s70 = sphi 0, %s67
      %s71 = sphi 0, %s70
      %s87 = sphi 0, %s71
      %s93 = sphi 0, %s95
      %s96 = sphi 0, %s93
      %s97 = sphi 0, %s96
      %s113 = sphi 0, %s97
      %s119 = sphi 0, %s121
      %s122 = sphi 0, %s119
      %s123 = sphi 0, %s122
      %s139 = sphi 0, %s123
      %s143 = sphi 0, %s143
      %s145 = sphi 0, %s143
      %s146 = sphi 0, %s145
      %s160 = sphi 0, %s146
      %s166 = sphi 0, %s168
      %s169 = sphi 0, %s166
      %s170 = sphi 0, %s169
      %s186 = sphi 0, %s170
    $region4: #{descriptive_task_head.1} parent=1 // loop_header_branch
      %22 = sbr.rel (%p20) target = $region8
    $region5: #{descriptive_task_head.1} parent=1 // loop_body
      %s24 = ssub.s32 %s19, 1
      %s25 = ssub.s32 %s19, 2
      %s32 = sadd.s32 1, %s27
      %p33 = scmp.ge.s32.totalorder %s32, 4
      %s34 = scalar_select %p33, 0, %s32
      %s35 = sadd.s32 1, %s26
      %s36 = scalar_select %p33, %s35, %s26
      %p37 = scmp.ge.s32.totalorder %s36, 1
      %s38 = scalar_select %p37, 0, %s36
      %s39 = ssub.s32 %s26, %s38
      %p40 = scmp.eq.s32.totalorder %s39, 0
      %s42 = sadd.s32 %s41, 1
      %s43 = scalar_select %p40, %s41, %s42
      %p46 = pneg %p40
      %p47 = scmp.eq.s32.totalorder %s19, 3
      %p48 = por %p46, %p47
      %p49 = scmp.ne.s32.totalorder %s41, %s44
      %p50 = scmp.eq.s32.totalorder %s19, 0
      %p51 = por %p49, %p50
      %p52 = scmp.ne.s32.totalorder %s41, %s44
      %p53 = scmp.eq.s32.totalorder %s24, 3
      %p54 = por %p52, %p53
      %p55 = scmp.ne.s32.totalorder %s44, %s45
      %p56 = scmp.eq.s32.totalorder %s24, 0
      %p57 = por %p55, %p56
      %p58 = scmp.ne.s32.totalorder %s44, %s45
      %p59 = scmp.eq.s32.totalorder %s25, 3
      %p60 = por %p58, %p59
      %p62 = scmp.ne.s32.totalorder %s45, %s61
      %p63 = scmp.eq.s32.totalorder %s25, 0
      %p64 = por %p62, %p63
      %s65 = ssub.s32 %s27, %s34
      %p66 = scmp.eq.s32.totalorder %s65, 0
      %s68 = sadd.s32 %s67, 1
      %s69 = scalar_select %p66, %s67, %s68
      %p72 = pneg %p66
      %p73 = scmp.eq.s32.totalorder %s19, 3
      %p74 = por %p72, %p73
      %p75 = scmp.ne.s32.totalorder %s67, %s70
      %p76 = scmp.eq.s32.totalorder %s19, 0
      %p77 = por %p75, %p76
      %p78 = scmp.ne.s32.totalorder %s67, %s70
      %p79 = scmp.eq.s32.totalorder %s24, 3
      %p80 = por %p78, %p79
      %p81 = scmp.ne.s32.totalorder %s70, %s71
      %p82 = scmp.eq.s32.totalorder %s24, 0
      %p83 = por %p81, %p82
      %p84 = scmp.ne.s32.totalorder %s70, %s71
      %p85 = scmp.eq.s32.totalorder %s25, 3
      %p86 = por %p84, %p85
      %p88 = scmp.ne.s32.totalorder %s71, %s87
      %p89 = scmp.eq.s32.totalorder %s25, 0
      %p90 = por %p88, %p89
      %s91 = ssub.s32 %s27, %s34
      %p92 = scmp.eq.s32.totalorder %s91, 0
      %s94 = sadd.s32 %s93, 1
      %s95 = scalar_select %p92, %s93, %s94
      %p98 = pneg %p92
      %p99 = scmp.eq.s32.totalorder %s19, 3
      %p100 = por %p98, %p99
      %p101 = scmp.ne.s32.totalorder %s93, %s96
      %p102 = scmp.eq.s32.totalorder %s19, 0
      %p103 = por %p101, %p102
      %p104 = scmp.ne.s32.totalorder %s93, %s96
      %p105 = scmp.eq.s32.totalorder %s24, 3
      %p106 = por %p104, %p105
      %p107 = scmp.ne.s32.totalorder %s96, %s97
      %p108 = scmp.eq.s32.totalorder %s24, 0
      %p109 = por %p107, %p108
      %p110 = scmp.ne.s32.totalorder %s96, %s97
      %p111 = scmp.eq.s32.totalorder %s25, 3
      %p112 = por %p110, %p111
      %p114 = scmp.ne.s32.totalorder %s97, %s113
      %p115 = scmp.eq.s32.totalorder %s25, 0
      %p116 = por %p114, %p115
      %s117 = ssub.s32 %s27, %s34
      %p118 = scmp.eq.s32.totalorder %s117, 0
      %s120 = sadd.s32 %s119, 1
      %s121 = scalar_select %p118, %s119, %s120
      %p124 = pneg %p118
      %p125 = scmp.eq.s32.totalorder %s19, 3
      %p126 = por %p124, %p125
      %p127 = scmp.ne.s32.totalorder %s119, %s122
      %p128 = scmp.eq.s32.totalorder %s19, 0
      %p129 = por %p127, %p128
      %p130 = scmp.ne.s32.totalorder %s119, %s122
      %p131 = scmp.eq.s32.totalorder %s24, 3
      %p132 = por %p130, %p131
      %p133 = scmp.ne.s32.totalorder %s122, %s123
      %p134 = scmp.eq.s32.totalorder %s24, 0
      %p135 = por %p133, %p134
      %p136 = scmp.ne.s32.totalorder %s122, %s123
      %p137 = scmp.eq.s32.totalorder %s25, 3
      %p138 = por %p136, %p137
      %p140 = scmp.ne.s32.totalorder %s123, %s139
      %p141 = scmp.eq.s32.totalorder %s25, 0
      %p142 = por %p140, %p141
      %s144 = sadd.s32 %s143, 1
      %p147 = scmp.eq.s32.totalorder %s19, 3
      %p148 = scmp.ne.s32.totalorder %s143, %s145
      %p149 = scmp.eq.s32.totalorder %s19, 0
      %p150 = por %p148, %p149
      %p151 = scmp.ne.s32.totalorder %s143, %s145
      %p152 = scmp.eq.s32.totalorder %s24, 3
      %p153 = por %p151, %p152
      %p154 = scmp.ne.s32.totalorder %s145, %s146
      %p155 = scmp.eq.s32.totalorder %s24, 0
      %p156 = por %p154, %p155
      %p157 = scmp.ne.s32.totalorder %s145, %s146
      %p158 = scmp.eq.s32.totalorder %s25, 3
      %p159 = por %p157, %p158
      %p161 = scmp.ne.s32.totalorder %s146, %s160
      %p162 = scmp.eq.s32.totalorder %s25, 0
      %p163 = por %p161, %p162
      %s164 = ssub.s32 %s26, %s38
      %p165 = scmp.eq.s32.totalorder %s164, 0
      %s167 = sadd.s32 %s166, 1
      %s168 = scalar_select %p165, %s166, %s167
      %p171 = pneg %p165
      %p172 = scmp.eq.s32.totalorder %s19, 3
      %p173 = por %p171, %p172
      %p174 = scmp.ne.s32.totalorder %s166, %s169
      %p175 = scmp.eq.s32.totalorder %s19, 0
      %p176 = por %p174, %p175
      %p177 = scmp.ne.s32.totalorder %s166, %s169
      %p178 = scmp.eq.s32.totalorder %s24, 3
      %p179 = por %p177, %p178
      %p180 = scmp.ne.s32.totalorder %s169, %s170
      %p181 = scmp.eq.s32.totalorder %s24, 0
      %p182 = por %p180, %p181
      %p183 = scmp.ne.s32.totalorder %s169, %s170
      %p184 = scmp.eq.s32.totalorder %s25, 3
      %p185 = por %p183, %p184
      %p187 = scmp.ne.s32.totalorder %s170, %s186
      %p188 = scmp.eq.s32.totalorder %s25, 0
      %p189 = por %p187, %p188
      %p190 = scmp.le.s32.totalorder 1, %s19
      %p191 = scmp.lt.s32.totalorder %s19, 5
      %p192 = pnand %p190, %p191
      %p193 = pneg %p192
      // Predicated region
      $region9: #{descriptive_task_head.1} parent=5 // pred_check
        _
      $region10: #{descriptive_task_head.1} parent=5 // pred_check_branch
        %195 = sbr.rel (%p192) target = $region12
      $region11: #{descriptive_task_head.1} parent=5 // pred_region
        %s196 = ssub.s32 %s19, 1
        // Predicated region
        $region13: #{descriptive_task_head.1} parent=11 // pred_check
          %p197 = pneg %p57
        $region14: #{descriptive_task_head.1} parent=11 // pred_check_branch
          %199 = sbr.rel (%p197) target = $region16
        $region15: #{descriptive_task_head.1} parent=11 // pred_region
          %s200 = smul.u32 2, %s28
          %s202 = ssub.s32 3072, 3072
          %203 = vsyncadd [#allocation4], %s202
          %s204 = smul.addr %s200, 12
          %s205 = smul.addr %s204, 128
          %s206 = scalar_lea.hbm %s0, %s205
          %s207 = sshll.u32 [#allocation3], 4
          %s208 = int_to_ptr.vmem [resolvable:$true] %s207
          %213 = dma.hbm_to_vmem [thread:$0]  %s206, 3072, %s208, [#allocation4], 1536, 1536, 96
        $region16: #{descriptive_task_head.1} parent=11 // pred_fallthru
          _
        // Predicated region
        $region17: #{descriptive_task_head.1} parent=11 // pred_check
          %p214 = pneg %p156
        $region18: #{descriptive_task_head.1} parent=11 // pred_check_branch
          %216 = sbr.rel (%p214) target = $region20
        $region19: #{descriptive_task_head.1} parent=11 // pred_region
          %s218 = ssub.s32 16, 16
          %219 = vsyncadd [#allocation10], %s218
          %s221 = sshll.u32 [#allocation11], 4
          %s222 = int_to_ptr.vmem [resolvable:$true] %s221
          %224 = dma.hbm_to_vmem [thread:$0]  %s4, 16, %s222, [#allocation10]
        $region20: #{descriptive_task_head.1} parent=11 // pred_fallthru
          _
      $region12: #{descriptive_task_head.1} parent=5 // pred_fallthru
        _
      %p225 = scmp.lt.s32.totalorder %s19, 4
      // Predicated region
      $region21: #{descriptive_task_head.1} parent=5 // pred_check
        %p226 = pneg %p225
      $region22: #{descriptive_task_head.1} parent=5 // pred_check_branch
        %228 = sbr.rel (%p226) target = $region24
      $region23: #{descriptive_task_head.1} parent=5 // pred_region
        // Predicated region
        $region25: #{descriptive_task_head.1} parent=23 // pred_check
          %p229 = pneg %p77
        $region26: #{descriptive_task_head.1} parent=23 // pred_check_branch
          %231 = sbr.rel (%p229) target = $region28
        $region27: #{descriptive_task_head.1} parent=23 // pred_region
          %s232 = sand.u32 %s19, 1
          %s233 = scalar_lea.sflag [#allocation7], %s232
          %s234 = sand.u32 %s67, 1
          %s235 = smul.addr %s234, 1536
          %s236 = scalar_lea.vmem [#allocation6], %s235
          %s237 = smul.u32 2, %s27
          %s239 = ssub.s32 24576, 24576
          %240 = vsyncadd %s233, %s239
          %s241 = smul.addr %s237, 64
          %s242 = scalar_lea.hbm %s1, %s241
          %s243 = sshll.u32 %s236, 4
          %s244 = int_to_ptr.vmem [resolvable:$true] %s243
          %249 = dma.hbm_to_vmem [thread:$0]  %s242, 24576, %s244, %s233, 512, 128, 8
        $region28: #{descriptive_task_head.1} parent=23 // pred_fallthru
          _
        // Predicated region
        $region29: #{descriptive_task_head.1} parent=23 // pred_check
          %p250 = pneg %p103
        $region30: #{descriptive_task_head.1} parent=23 // pred_check_branch
          %252 = sbr.rel (%p250) target = $region32
        $region31: #{descriptive_task_head.1} parent=23 // pred_region
          %s253 = sand.u32 %s19, 1
          %s254 = scalar_lea.sflag [#allocation7], %s253
          %s255 = sand.u32 %s93, 1
          %s256 = smul.addr %s255, 2
          %s257 = scalar_lea.vmem [#allocation8], %s256
          %s258 = smul.u32 2, %s27
          %s260 = ssub.s32 32, 32
          %261 = vsyncadd %s254, %s260
          %s262 = smul.addr %s258, 16
          %s263 = scalar_lea.hbm %s2, %s262
          %s265 = sshll.u32 %s257, 4
          %s266 = int_to_ptr.vmem [resolvable:$true] %s265
          %268 = dma.hbm_to_vmem [thread:$0]  %s263, 32, %s266, %s254
        $region32: #{descriptive_task_head.1} parent=23 // pred_fallthru
          _
        // Predicated region
        $region33: #{descriptive_task_head.1} parent=23 // pred_check
          %p269 = pneg %p129
        $region34: #{descriptive_task_head.1} parent=23 // pred_check_branch
          %271 = sbr.rel (%p269) target = $region36
        $region35: #{descriptive_task_head.1} parent=23 // pred_region
          %s272 = sand.u32 %s19, 1
          %s273 = scalar_lea.sflag [#allocation10], %s272
          %s274 = sand.u32 %s119, 1
          %s275 = smul.addr %s274, 128
          %s276 = scalar_lea.vmem [#allocation9], %s275
          %s277 = smul.u32 32, %s27
          %s279 = ssub.s32 2048, 2048
          %280 = vsyncadd %s273, %s279
          %s281 = smul.addr %s277, 64
          %s282 = scalar_lea.hbm %s3, %s281
          %s283 = sshll.u32 %s276, 4
          %s284 = int_to_ptr.vmem [resolvable:$true] %s283
          %289 = dma.hbm_to_vmem [thread:$0]  %s282, 2048, %s284, %s273, 64, 64, 4
        $region36: #{descriptive_task_head.1} parent=23 // pred_fallthru
          _
      $region24: #{descriptive_task_head.1} parent=5 // pred_fallthru
        _
      %p290 = scmp.le.s32.totalorder 1, %s19
      %p291 = scmp.lt.s32.totalorder %s19, 5
      %p292 = pnand %p290, %p291
      %p293 = pneg %p292
      // Predicated region
      $region37: #{descriptive_task_head.1} parent=5 // pred_check
        _
      $region38: #{descriptive_task_head.1} parent=5 // pred_check_branch
        %295 = sbr.rel (%p292) target = $region40
      $region39: #{descriptive_task_head.1} parent=5 // pred_region
        %s296 = ssub.s32 %s19, 1
        // Predicated region
        $region41: #{descriptive_task_head.1} parent=39 // pred_check
          %p297 = pneg %p57
        $region42: #{descriptive_task_head.1} parent=39 // pred_check_branch
          %299 = sbr.rel (%p297) target = $region44
        $region43: #{descriptive_task_head.1} parent=39 // pred_region
          %300 = dma.done [#allocation4], 3072
        $region44: #{descriptive_task_head.1} parent=39 // pred_fallthru
          _
        %s301 = sand.u32 %s24, 1
        %s302 = scalar_lea.sflag [#allocation7], %s301
        %s303 = sand.u32 %s70, 1
        %s304 = smul.addr %s303, 1536
        %s305 = scalar_lea.vmem [#allocation6], %s304
        // Predicated region
        $region45: #{descriptive_task_head.1} parent=39 // pred_check
          %p306 = pneg %p83
        $region46: #{descriptive_task_head.1} parent=39 // pred_check_branch
          %308 = sbr.rel (%p306) target = $region48
        $region47: #{descriptive_task_head.1} parent=39 // pred_region
          %309 = dma.done %s302, 24576
        $region48: #{descriptive_task_head.1} parent=39 // pred_fallthru
          _
        %s310 = sand.u32 %s24, 1
        %s311 = scalar_lea.sflag [#allocation7], %s310
        %s312 = sand.u32 %s96, 1
        %s313 = smul.addr %s312, 2
        %s314 = scalar_lea.vmem [#allocation8], %s313
        // Predicated region
        $region49: #{descriptive_task_head.1} parent=39 // pred_check
          %p315 = pneg %p109
        $region50: #{descriptive_task_head.1} parent=39 // pred_check_branch
          %317 = sbr.rel (%p315) target = $region52
        $region51: #{descriptive_task_head.1} parent=39 // pred_region
          %318 = dma.done %s311, 32
        $region52: #{descriptive_task_head.1} parent=39 // pred_fallthru
          _
        %s319 = sand.u32 %s24, 1
        %s320 = scalar_lea.sflag [#allocation10], %s319
        %s321 = sand.u32 %s122, 1
        %s322 = smul.addr %s321, 128
        %s323 = scalar_lea.vmem [#allocation9], %s322
        // Predicated region
        $region53: #{descriptive_task_head.1} parent=39 // pred_check
          %p324 = pneg %p135
        $region54: #{descriptive_task_head.1} parent=39 // pred_check_branch
          %326 = sbr.rel (%p324) target = $region56
        $region55: #{descriptive_task_head.1} parent=39 // pred_region
          %327 = dma.done %s320, 2048
        $region56: #{descriptive_task_head.1} parent=39 // pred_fallthru
          _
        // Predicated region
        $region57: #{descriptive_task_head.1} parent=39 // pred_check
          %p328 = pneg %p156
        $region58: #{descriptive_task_head.1} parent=39 // pred_check_branch
          %330 = sbr.rel (%p328) target = $region60
        $region59: #{descriptive_task_head.1} parent=39 // pred_region
          %331 = dma.done [#allocation10], 16
        $region60: #{descriptive_task_head.1} parent=39 // pred_fallthru
          _
        %p332 = pneg %p57
        %p333 = pneg %p54
        %s334 = sand.u32 %s24, 1
        %s335 = scalar_lea.sflag [#allocation7], %s334
        %s336 = sand.u32 %s70, 1
        %s337 = smul.addr %s336, 1536
        %s338 = scalar_lea.vmem [#allocation6], %s337
        %p339 = pneg %p83
        %p340 = pneg %p80
        %s341 = sand.u32 %s24, 1
        %s342 = scalar_lea.sflag [#allocation7], %s341
        %s343 = sand.u32 %s96, 1
        %s344 = smul.addr %s343, 2
        %s345 = scalar_lea.vmem [#allocation8], %s344
        %p346 = pneg %p109
        %p347 = pneg %p106
        %s348 = sand.u32 %s24, 1
        %s349 = scalar_lea.sflag [#allocation10], %s348
        %s350 = sand.u32 %s122, 1
        %s351 = smul.addr %s350, 128
        %s352 = scalar_lea.vmem [#allocation9], %s351
        %p353 = pneg %p135
        %p354 = pneg %p132
        %p355 = pneg %p156
        %p356 = pneg %p153
        %p357 = pneg %p182
        %p358 = pneg %p179
        %s359 = smul.u32 2, %s28
        %s360 = smul.u32 2, %s29
        %s361 = smul.u32 2, %s29
        %s362 = smul.u32 32, %s29
        %s363 = smul.u32 2, %s28
        %p365 = scmp.eq.s32.totalorder %s29, 0
        // Predicated region
        $region61: #{descriptive_task_head.1} parent=39 // pred_check
          %p366 = pneg %p365
        $region62: #{descriptive_task_head.1} parent=39 // pred_check_branch
          %368 = sbr.rel (%p366) target = $region64
        $region63: #{descriptive_task_head.1} parent=39 // pred_region
          %369 = vst [vmem:[#allocation2] sm:$0xff] 0.0
          %370 = vst [vmem:[#allocation2 + $0x8] sm:$0xff] 0.0
        $region64: #{descriptive_task_head.1} parent=39 // pred_fallthru
          _
        %v371 = vld [vmem:[#allocation3] sm:$0xff]
        %v372 = vld [vmem:[#allocation3 + $0x8] sm:$0xff]
        %v373 = vld [vmem:[#allocation3 + $0x10] sm:$0xff]
        %v374 = vld [vmem:[#allocation3 + $0x18] sm:$0xff]
        %v375 = vld [vmem:[#allocation3 + $0x20] sm:$0xff]
        %v376 = vld [vmem:[#allocation3 + $0x28] sm:$0xff]
        %v377 = vld [vmem:[#allocation3 + $0x30] sm:$0xff]
        %v378 = vld [vmem:[#allocation3 + $0x38] sm:$0xff]
        %v379 = vld [vmem:[#allocation3 + $0x40] sm:$0xff]
        %v380 = vld [vmem:[#allocation3 + $0x48] sm:$0xff]
        %v381 = vld [vmem:[#allocation3 + $0x50] sm:$0xff]
        %v382 = vld [vmem:[#allocation3 + $0x58] sm:$0xff]
        %v383 = vld [vmem:[#allocation3 + $0x60] sm:$0xff]
        %v384 = vld [vmem:[#allocation3 + $0x68] sm:$0xff]
        %v385 = vld [vmem:[#allocation3 + $0x70] sm:$0xff]
        %v386 = vld [vmem:[#allocation3 + $0x78] sm:$0xff]
        %v387 = vld [vmem:[#allocation3 + $0x80] sm:$0xff]
        %v388 = vld [vmem:[#allocation3 + $0x88] sm:$0xff]
        %v389 = vld [vmem:[#allocation3 + $0x90] sm:$0xff]
        %v390 = vld [vmem:[#allocation3 + $0x98] sm:$0xff]
        %v391 = vld [vmem:[#allocation3 + $0xa0] sm:$0xff]
        %v392 = vld [vmem:[#allocation3 + $0xa8] sm:$0xff]
        %v393 = vld [vmem:[#allocation3 + $0xb0] sm:$0xff]
        %v394 = vld [vmem:[#allocation3 + $0xb8] sm:$0xff]
        %v395 = vpack.c.bf16 %v383, %v371
        %v396 = vpack.c.bf16 %v384, %v372
        %v397 = vpack.c.bf16 %v385, %v373
        %v398 = vpack.c.bf16 %v386, %v374
        %v399 = vpack.c.bf16 %v387, %v375
        %v400 = vpack.c.bf16 %v388, %v376
        %v401 = vpack.c.bf16 %v389, %v377
        %v402 = vpack.c.bf16 %v390, %v378
        %v403 = vpack.c.bf16 %v391, %v379
        %v404 = vpack.c.bf16 %v392, %v380
        %v405 = vpack.c.bf16 %v393, %v381
        %v406 = vpack.c.bf16 %v394, %v382
        %v407 = vld [vmem:[%s305] sm:$0xff]
        %v408 = vld [vmem:[%s305 + $0x8] sm:$0xff]
        %v409 = vld [vmem:[%s305 + $0x10] sm:$0xff]
        %v410 = vld [vmem:[%s305 + $0x18] sm:$0xff]
        %v411 = vld [vmem:[%s305 + $0x20] sm:$0xff]
        %v412 = vld [vmem:[%s305 + $0x28] sm:$0xff]
        %v413 = vld [vmem:[%s305 + $0x30] sm:$0xff]
        %v414 = vld [vmem:[%s305 + $0x38] sm:$0xff]
        %v415 = vld [vmem:[%s305 + $0x40] sm:$0xff]
        %v416 = vld [vmem:[%s305 + $0x48] sm:$0xff]
        %v417 = vld [vmem:[%s305 + $0x50] sm:$0xff]
        %v418 = vld [vmem:[%s305 + $0x58] sm:$0xff]
        %v419 = vld [vmem:[%s305 + $0x60] sm:$0xff]
        %v420 = vld [vmem:[%s305 + $0x68] sm:$0xff]
        %v421 = vld [vmem:[%s305 + $0x70] sm:$0xff]
        %v422 = vld [vmem:[%s305 + $0x78] sm:$0xff]
        %v423 = vld [vmem:[%s305 + $0x80] sm:$0xff]
        %v424 = vld [vmem:[%s305 + $0x88] sm:$0xff]
        %v425 = vld [vmem:[%s305 + $0x90] sm:$0xff]
        %v426 = vld [vmem:[%s305 + $0x98] sm:$0xff]
        %v427 = vld [vmem:[%s305 + $0xa0] sm:$0xff]
        %v428 = vld [vmem:[%s305 + $0xa8] sm:$0xff]
        %v429 = vld [vmem:[%s305 + $0xb0] sm:$0xff]
        %v430 = vld [vmem:[%s305 + $0xb8] sm:$0xff]
        %v431 = vld [vmem:[%s305 + $0xc0] sm:$0xff]
        %v432 = vld [vmem:[%s305 + $0xc8] sm:$0xff]
        %v433 = vld [vmem:[%s305 + $0xd0] sm:$0xff]
        %v434 = vld [vmem:[%s305 + $0xd8] sm:$0xff]
        %v435 = vld [vmem:[%s305 + $0xe0] sm:$0xff]
        %v436 = vld [vmem:[%s305 + $0xe8] sm:$0xff]
        %v437 = vld [vmem:[%s305 + $0xf0] sm:$0xff]
        %v438 = vld [vmem:[%s305 + $0xf8] sm:$0xff]
        %v439 = vld [vmem:[%s305 + $0x100] sm:$0xff]
        %v440 = vld [vmem:[%s305 + $0x108] sm:$0xff]
        %v441 = vld [vmem:[%s305 + $0x110] sm:$0xff]
        %v442 = vld [vmem:[%s305 + $0x118] sm:$0xff]
        %v443 = vld [vmem:[%s305 + $0x120] sm:$0xff]
        %v444 = vld [vmem:[%s305 + $0x128] sm:$0xff]
        %v445 = vld [vmem:[%s305 + $0x130] sm:$0xff]
        %v446 = vld [vmem:[%s305 + $0x138] sm:$0xff]
        %v447 = vld [vmem:[%s305 + $0x140] sm:$0xff]
        %v448 = vld [vmem:[%s305 + $0x148] sm:$0xff]
        %v449 = vld [vmem:[%s305 + $0x150] sm:$0xff]
        %v450 = vld [vmem:[%s305 + $0x158] sm:$0xff]
        %v451 = vld [vmem:[%s305 + $0x160] sm:$0xff]
        %v452 = vld [vmem:[%s305 + $0x168] sm:$0xff]
        %v453 = vld [vmem:[%s305 + $0x170] sm:$0xff]
        %v454 = vld [vmem:[%s305 + $0x178] sm:$0xff]
        %v455 = vld [vmem:[%s305 + $0x180] sm:$0xff]
        %v456 = vld [vmem:[%s305 + $0x188] sm:$0xff]
        %v457 = vld [vmem:[%s305 + $0x190] sm:$0xff]
        %v458 = vld [vmem:[%s305 + $0x198] sm:$0xff]
        %v459 = vld [vmem:[%s305 + $0x1a0] sm:$0xff]
        %v460 = vld [vmem:[%s305 + $0x1a8] sm:$0xff]
        %v461 = vld [vmem:[%s305 + $0x1b0] sm:$0xff]
        %v462 = vld [vmem:[%s305 + $0x1b8] sm:$0xff]
        %v463 = vld [vmem:[%s305 + $0x1c0] sm:$0xff]
        %v464 = vld [vmem:[%s305 + $0x1c8] sm:$0xff]
        %v465 = vld [vmem:[%s305 + $0x1d0] sm:$0xff]
        %v466 = vld [vmem:[%s305 + $0x1d8] sm:$0xff]
        %v467 = vld [vmem:[%s305 + $0x1e0] sm:$0xff]
        %v468 = vld [vmem:[%s305 + $0x1e8] sm:$0xff]
        %v469 = vld [vmem:[%s305 + $0x1f0] sm:$0xff]
        %v470 = vld [vmem:[%s305 + $0x1f8] sm:$0xff]
        %v471 = vld [vmem:[%s305 + $0x200] sm:$0xff]
        %v472 = vld [vmem:[%s305 + $0x208] sm:$0xff]
        %v473 = vld [vmem:[%s305 + $0x210] sm:$0xff]
        %v474 = vld [vmem:[%s305 + $0x218] sm:$0xff]
        %v475 = vld [vmem:[%s305 + $0x220] sm:$0xff]
        %v476 = vld [vmem:[%s305 + $0x228] sm:$0xff]
        %v477 = vld [vmem:[%s305 + $0x230] sm:$0xff]
        %v478 = vld [vmem:[%s305 + $0x238] sm:$0xff]
        %v479 = vld [vmem:[%s305 + $0x240] sm:$0xff]
        %v480 = vld [vmem:[%s305 + $0x248] sm:$0xff]
        %v481 = vld [vmem:[%s305 + $0x250] sm:$0xff]
        %v482 = vld [vmem:[%s305 + $0x258] sm:$0xff]
        %v483 = vld [vmem:[%s305 + $0x260] sm:$0xff]
        %v484 = vld [vmem:[%s305 + $0x268] sm:$0xff]
        %v485 = vld [vmem:[%s305 + $0x270] sm:$0xff]
        %v486 = vld [vmem:[%s305 + $0x278] sm:$0xff]
        %v487 = vld [vmem:[%s305 + $0x280] sm:$0xff]
        %v488 = vld [vmem:[%s305 + $0x288] sm:$0xff]
        %v489 = vld [vmem:[%s305 + $0x290] sm:$0xff]
        %v490 = vld [vmem:[%s305 + $0x298] sm:$0xff]
        %v491 = vld [vmem:[%s305 + $0x2a0] sm:$0xff]
        %v492 = vld [vmem:[%s305 + $0x2a8] sm:$0xff]
        %v493 = vld [vmem:[%s305 + $0x2b0] sm:$0xff]
        %v494 = vld [vmem:[%s305 + $0x2b8] sm:$0xff]
        %v495 = vld [vmem:[%s305 + $0x2c0] sm:$0xff]
        %v496 = vld [vmem:[%s305 + $0x2c8] sm:$0xff]
        %v497 = vld [vmem:[%s305 + $0x2d0] sm:$0xff]
        %v498 = vld [vmem:[%s305 + $0x2d8] sm:$0xff]
        %v499 = vld [vmem:[%s305 + $0x2e0] sm:$0xff]
        %v500 = vld [vmem:[%s305 + $0x2e8] sm:$0xff]
        %v501 = vld [vmem:[%s305 + $0x2f0] sm:$0xff]
        %v502 = vld [vmem:[%s305 + $0x2f8] sm:$0xff]
        %v503 = vld [vmem:[%s305 + $0x300] sm:$0xff]
        %v504 = vld [vmem:[%s305 + $0x308] sm:$0xff]
        %v505 = vld [vmem:[%s305 + $0x310] sm:$0xff]
        %v506 = vld [vmem:[%s305 + $0x318] sm:$0xff]
        %v507 = vld [vmem:[%s305 + $0x320] sm:$0xff]
        %v508 = vld [vmem:[%s305 + $0x328] sm:$0xff]
        %v509 = vld [vmem:[%s305 + $0x330] sm:$0xff]
        %v510 = vld [vmem:[%s305 + $0x338] sm:$0xff]
        %v511 = vld [vmem:[%s305 + $0x340] sm:$0xff]
        %v512 = vld [vmem:[%s305 + $0x348] sm:$0xff]
        %v513 = vld [vmem:[%s305 + $0x350] sm:$0xff]
        %v514 = vld [vmem:[%s305 + $0x358] sm:$0xff]
        %v515 = vld [vmem:[%s305 + $0x360] sm:$0xff]
        %v516 = vld [vmem:[%s305 + $0x368] sm:$0xff]
        %v517 = vld [vmem:[%s305 + $0x370] sm:$0xff]
        %v518 = vld [vmem:[%s305 + $0x378] sm:$0xff]
        %v519 = vld [vmem:[%s305 + $0x380] sm:$0xff]
        %v520 = vld [vmem:[%s305 + $0x388] sm:$0xff]
        %v521 = vld [vmem:[%s305 + $0x390] sm:$0xff]
        %v522 = vld [vmem:[%s305 + $0x398] sm:$0xff]
        %v523 = vld [vmem:[%s305 + $0x3a0] sm:$0xff]
        %v524 = vld [vmem:[%s305 + $0x3a8] sm:$0xff]
        %v525 = vld [vmem:[%s305 + $0x3b0] sm:$0xff]
        %v526 = vld [vmem:[%s305 + $0x3b8] sm:$0xff]
        %v527 = vld [vmem:[%s305 + $0x3c0] sm:$0xff]
        %v528 = vld [vmem:[%s305 + $0x3c8] sm:$0xff]
        %v529 = vld [vmem:[%s305 + $0x3d0] sm:$0xff]
        %v530 = vld [vmem:[%s305 + $0x3d8] sm:$0xff]
        %v531 = vld [vmem:[%s305 + $0x3e0] sm:$0xff]
        %v532 = vld [vmem:[%s305 + $0x3e8] sm:$0xff]
        %v533 = vld [vmem:[%s305 + $0x3f0] sm:$0xff]
        %v534 = vld [vmem:[%s305 + $0x3f8] sm:$0xff]
        %v535 = vld [vmem:[%s305 + $0x400] sm:$0xff]
        %v536 = vld [vmem:[%s305 + $0x408] sm:$0xff]
        %v537 = vld [vmem:[%s305 + $0x410] sm:$0xff]
        %v538 = vld [vmem:[%s305 + $0x418] sm:$0xff]
        %v539 = vld [vmem:[%s305 + $0x420] sm:$0xff]
        %v540 = vld [vmem:[%s305 + $0x428] sm:$0xff]
        %v541 = vld [vmem:[%s305 + $0x430] sm:$0xff]
        %v542 = vld [vmem:[%s305 + $0x438] sm:$0xff]
        %v543 = vld [vmem:[%s305 + $0x440] sm:$0xff]
        %v544 = vld [vmem:[%s305 + $0x448] sm:$0xff]
        %v545 = vld [vmem:[%s305 + $0x450] sm:$0xff]
        %v546 = vld [vmem:[%s305 + $0x458] sm:$0xff]
        %v547 = vld [vmem:[%s305 + $0x460] sm:$0xff]
        %v548 = vld [vmem:[%s305 + $0x468] sm:$0xff]
        %v549 = vld [vmem:[%s305 + $0x470] sm:$0xff]
        %v550 = vld [vmem:[%s305 + $0x478] sm:$0xff]
        %v551 = vld [vmem:[%s305 + $0x480] sm:$0xff]
        %v552 = vld [vmem:[%s305 + $0x488] sm:$0xff]
        %v553 = vld [vmem:[%s305 + $0x490] sm:$0xff]
        %v554 = vld [vmem:[%s305 + $0x498] sm:$0xff]
        %v555 = vld [vmem:[%s305 + $0x4a0] sm:$0xff]
        %v556 = vld [vmem:[%s305 + $0x4a8] sm:$0xff]
        %v557 = vld [vmem:[%s305 + $0x4b0] sm:$0xff]
        %v558 = vld [vmem:[%s305 + $0x4b8] sm:$0xff]
        %v559 = vld [vmem:[%s305 + $0x4c0] sm:$0xff]
        %v560 = vld [vmem:[%s305 + $0x4c8] sm:$0xff]
        %v561 = vld [vmem:[%s305 + $0x4d0] sm:$0xff]
        %v562 = vld [vmem:[%s305 + $0x4d8] sm:$0xff]
        %v563 = vld [vmem:[%s305 + $0x4e0] sm:$0xff]
        %v564 = vld [vmem:[%s305 + $0x4e8] sm:$0xff]
        %v565 = vld [vmem:[%s305 + $0x4f0] sm:$0xff]
        %v566 = vld [vmem:[%s305 + $0x4f8] sm:$0xff]
        %v567 = vld [vmem:[%s305 + $0x500] sm:$0xff]
        %v568 = vld [vmem:[%s305 + $0x508] sm:$0xff]
        %v569 = vld [vmem:[%s305 + $0x510] sm:$0xff]
        %v570 = vld [vmem:[%s305 + $0x518] sm:$0xff]
        %v571 = vld [vmem:[%s305 + $0x520] sm:$0xff]
        %v572 = vld [vmem:[%s305 + $0x528] sm:$0xff]
        %v573 = vld [vmem:[%s305 + $0x530] sm:$0xff]
        %v574 = vld [vmem:[%s305 + $0x538] sm:$0xff]
        %v575 = vld [vmem:[%s305 + $0x540] sm:$0xff]
        %v576 = vld [vmem:[%s305 + $0x548] sm:$0xff]
        %v577 = vld [vmem:[%s305 + $0x550] sm:$0xff]
        %v578 = vld [vmem:[%s305 + $0x558] sm:$0xff]
        %v579 = vld [vmem:[%s305 + $0x560] sm:$0xff]
        %v580 = vld [vmem:[%s305 + $0x568] sm:$0xff]
        %v581 = vld [vmem:[%s305 + $0x570] sm:$0xff]
        %v582 = vld [vmem:[%s305 + $0x578] sm:$0xff]
        %v583 = vld [vmem:[%s305 + $0x580] sm:$0xff]
        %v584 = vld [vmem:[%s305 + $0x588] sm:$0xff]
        %v585 = vld [vmem:[%s305 + $0x590] sm:$0xff]
        %v586 = vld [vmem:[%s305 + $0x598] sm:$0xff]
        %v587 = vld [vmem:[%s305 + $0x5a0] sm:$0xff]
        %v588 = vld [vmem:[%s305 + $0x5a8] sm:$0xff]
        %v589 = vld [vmem:[%s305 + $0x5b0] sm:$0xff]
        %v590 = vld [vmem:[%s305 + $0x5b8] sm:$0xff]
        %v591 = vld [vmem:[%s305 + $0x5c0] sm:$0xff]
        %v592 = vld [vmem:[%s305 + $0x5c8] sm:$0xff]
        %v593 = vld [vmem:[%s305 + $0x5d0] sm:$0xff]
        %v594 = vld [vmem:[%s305 + $0x5d8] sm:$0xff]
        %v595 = vld [vmem:[%s305 + $0x5e0] sm:$0xff]
        %v596 = vld [vmem:[%s305 + $0x5e8] sm:$0xff]
        %v597 = vld [vmem:[%s305 + $0x5f0] sm:$0xff]
        %v598 = vld [vmem:[%s305 + $0x5f8] sm:$0xff]
        %v599 = vld [vmem:[%s314] sm:$0x3]
        %v601 = vlaneseq
        %v602 = vshrl.u32 %v601, 7
        %v603 = vsub.s32 0, %v602
        %v604 = vrot.slane %v599, %v603
        %v605 = vlaneseq
        %v606 = vshrl.u32 %v605, 7
        %v607 = vsub.s32 1, %v606
        %v608 = vrot.slane %v599, %v607
        %v803 = vunpack.c.l.b16 %v407
        %v804 = vunpack.c.h.b16 %v407
        %v805 = vunpack.c.l.b16 %v408
        %v806 = vunpack.c.h.b16 %v408
        %v807 = vunpack.c.l.b16 %v409
        %v808 = vunpack.c.h.b16 %v409
        %v809 = vunpack.c.l.b16 %v410
        %v810 = vunpack.c.h.b16 %v410
        %v811 = vunpack.c.l.b16 %v411
        %v812 = vunpack.c.h.b16 %v411
        %v813 = vunpack.c.l.b16 %v412
        %v814 = vunpack.c.h.b16 %v412
        %v815 = vunpack.c.l.b16 %v413
        %v816 = vunpack.c.h.b16 %v413
        %v817 = vunpack.c.l.b16 %v414
        %v818 = vunpack.c.h.b16 %v414
        %v819 = vunpack.c.l.b16 %v415
        %v820 = vunpack.c.h.b16 %v415
        %v821 = vunpack.c.l.b16 %v416
        %v822 = vunpack.c.h.b16 %v416
        %v823 = vunpack.c.l.b16 %v417
        %v824 = vunpack.c.h.b16 %v417
        %v825 = vunpack.c.l.b16 %v418
        %v826 = vunpack.c.h.b16 %v418
        %v827 = vunpack.c.l.b16 %v419
        %v828 = vunpack.c.h.b16 %v419
        %v829 = vunpack.c.l.b16 %v420
        %v830 = vunpack.c.h.b16 %v420
        %v831 = vunpack.c.l.b16 %v421
        %v832 = vunpack.c.h.b16 %v421
        %v833 = vunpack.c.l.b16 %v422
        %v834 = vunpack.c.h.b16 %v422
        %v835 = vunpack.c.l.b16 %v423
        %v836 = vunpack.c.h.b16 %v423
        %v837 = vunpack.c.l.b16 %v424
        %v838 = vunpack.c.h.b16 %v424
        %v839 = vunpack.c.l.b16 %v425
        %v840 = vunpack.c.h.b16 %v425
        %v841 = vunpack.c.l.b16 %v426
        %v842 = vunpack.c.h.b16 %v426
        %v843 = vunpack.c.l.b16 %v427
        %v844 = vunpack.c.h.b16 %v427
        %v845 = vunpack.c.l.b16 %v428
        %v846 = vunpack.c.h.b16 %v428
        %v847 = vunpack.c.l.b16 %v429
        %v848 = vunpack.c.h.b16 %v429
        %v849 = vunpack.c.l.b16 %v430
        %v850 = vunpack.c.h.b16 %v430
        %v851 = vunpack.c.l.b16 %v431
        %v852 = vunpack.c.h.b16 %v431
        %v853 = vunpack.c.l.b16 %v432
        %v854 = vunpack.c.h.b16 %v432
        %v855 = vunpack.c.l.b16 %v433
        %v856 = vunpack.c.h.b16 %v433
        %v857 = vunpack.c.l.b16 %v434
        %v858 = vunpack.c.h.b16 %v434
        %v859 = vunpack.c.l.b16 %v435
        %v860 = vunpack.c.h.b16 %v435
        %v861 = vunpack.c.l.b16 %v436
        %v862 = vunpack.c.h.b16 %v436
        %v863 = vunpack.c.l.b16 %v437
        %v864 = vunpack.c.h.b16 %v437
        %v865 = vunpack.c.l.b16 %v438
        %v866 = vunpack.c.h.b16 %v438
        %v867 = vunpack.c.l.b16 %v439
        %v868 = vunpack.c.h.b16 %v439
        %v869 = vunpack.c.l.b16 %v440
        %v870 = vunpack.c.h.b16 %v440
        %v871 = vunpack.c.l.b16 %v441
        %v872 = vunpack.c.h.b16 %v441
        %v873 = vunpack.c.l.b16 %v442
        %v874 = vunpack.c.h.b16 %v442
        %v875 = vunpack.c.l.b16 %v443
        %v876 = vunpack.c.h.b16 %v443
        %v877 = vunpack.c.l.b16 %v444
        %v878 = vunpack.c.h.b16 %v444
        %v879 = vunpack.c.l.b16 %v445
        %v880 = vunpack.c.h.b16 %v445
        %v881 = vunpack.c.l.b16 %v446
        %v882 = vunpack.c.h.b16 %v446
        %v883 = vunpack.c.l.b16 %v447
        %v884 = vunpack.c.h.b16 %v447
        %v885 = vunpack.c.l.b16 %v448
        %v886 = vunpack.c.h.b16 %v448
        %v887 = vunpack.c.l.b16 %v449
        %v888 = vunpack.c.h.b16 %v449
        %v889 = vunpack.c.l.b16 %v450
        %v890 = vunpack.c.h.b16 %v450
        %v891 = vunpack.c.l.b16 %v451
        %v892 = vunpack.c.h.b16 %v451
        %v893 = vunpack.c.l.b16 %v452
        %v894 = vunpack.c.h.b16 %v452
        %v895 = vunpack.c.l.b16 %v453
        %v896 = vunpack.c.h.b16 %v453
        %v897 = vunpack.c.l.b16 %v454
        %v898 = vunpack.c.h.b16 %v454
        %v899 = vunpack.c.l.b16 %v455
        %v900 = vunpack.c.h.b16 %v455
        %v901 = vunpack.c.l.b16 %v456
        %v902 = vunpack.c.h.b16 %v456
        %v903 = vunpack.c.l.b16 %v457
        %v904 = vunpack.c.h.b16 %v457
        %v905 = vunpack.c.l.b16 %v458
        %v906 = vunpack.c.h.b16 %v458
        %v907 = vunpack.c.l.b16 %v459
        %v908 = vunpack.c.h.b16 %v459
        %v909 = vunpack.c.l.b16 %v460
        %v910 = vunpack.c.h.b16 %v460
        %v911 = vunpack.c.l.b16 %v461
        %v912 = vunpack.c.h.b16 %v461
        %v913 = vunpack.c.l.b16 %v462
        %v914 = vunpack.c.h.b16 %v462
        %v915 = vunpack.c.l.b16 %v463
        %v916 = vunpack.c.h.b16 %v463
        %v917 = vunpack.c.l.b16 %v464
        %v918 = vunpack.c.h.b16 %v464
        %v919 = vunpack.c.l.b16 %v465
        %v920 = vunpack.c.h.b16 %v465
        %v921 = vunpack.c.l.b16 %v466
        %v922 = vunpack.c.h.b16 %v466
        %v923 = vunpack.c.l.b16 %v467
        %v924 = vunpack.c.h.b16 %v467
        %v925 = vunpack.c.l.b16 %v468
        %v926 = vunpack.c.h.b16 %v468
        %v927 = vunpack.c.l.b16 %v469
        %v928 = vunpack.c.h.b16 %v469
        %v929 = vunpack.c.l.b16 %v470
        %v930 = vunpack.c.h.b16 %v470
        %v931 = vunpack.c.l.b16 %v471
        %v932 = vunpack.c.h.b16 %v471
        %v933 = vunpack.c.l.b16 %v472
        %v934 = vunpack.c.h.b16 %v472
        %v935 = vunpack.c.l.b16 %v473
        %v936 = vunpack.c.h.b16 %v473
        %v937 = vunpack.c.l.b16 %v474
        %v938 = vunpack.c.h.b16 %v474
        %v939 = vunpack.c.l.b16 %v475
        %v940 = vunpack.c.h.b16 %v475
        %v941 = vunpack.c.l.b16 %v476
        %v942 = vunpack.c.h.b16 %v476
        %v943 = vunpack.c.l.b16 %v477
        %v944 = vunpack.c.h.b16 %v477
        %v945 = vunpack.c.l.b16 %v478
        %v946 = vunpack.c.h.b16 %v478
        %v947 = vunpack.c.l.b16 %v479
        %v948 = vunpack.c.h.b16 %v479
        %v949 = vunpack.c.l.b16 %v480
        %v950 = vunpack.c.h.b16 %v480
        %v951 = vunpack.c.l.b16 %v481
        %v952 = vunpack.c.h.b16 %v481
        %v953 = vunpack.c.l.b16 %v482
        %v954 = vunpack.c.h.b16 %v482
        %v955 = vunpack.c.l.b16 %v483
        %v956 = vunpack.c.h.b16 %v483
        %v957 = vunpack.c.l.b16 %v484
        %v958 = vunpack.c.h.b16 %v484
        %v959 = vunpack.c.l.b16 %v485
        %v960 = vunpack.c.h.b16 %v485
        %v961 = vunpack.c.l.b16 %v486
        %v962 = vunpack.c.h.b16 %v486
        %v963 = vunpack.c.l.b16 %v487
        %v964 = vunpack.c.h.b16 %v487
        %v965 = vunpack.c.l.b16 %v488
        %v966 = vunpack.c.h.b16 %v488
        %v967 = vunpack.c.l.b16 %v489
        %v968 = vunpack.c.h.b16 %v489
        %v969 = vunpack.c.l.b16 %v490
        %v970 = vunpack.c.h.b16 %v490
        %v971 = vunpack.c.l.b16 %v491
        %v972 = vunpack.c.h.b16 %v491
        %v973 = vunpack.c.l.b16 %v492
        %v974 = vunpack.c.h.b16 %v492
        %v975 = vunpack.c.l.b16 %v493
        %v976 = vunpack.c.h.b16 %v493
        %v977 = vunpack.c.l.b16 %v494
        %v978 = vunpack.c.h.b16 %v494
        %v979 = vunpack.c.l.b16 %v495
        %v980 = vunpack.c.h.b16 %v495
        %v981 = vunpack.c.l.b16 %v496
        %v982 = vunpack.c.h.b16 %v496
        %v983 = vunpack.c.l.b16 %v497
        %v984 = vunpack.c.h.b16 %v497
        %v985 = vunpack.c.l.b16 %v498
        %v986 = vunpack.c.h.b16 %v498
        %v987 = vunpack.c.l.b16 %v499
        %v988 = vunpack.c.h.b16 %v499
        %v989 = vunpack.c.l.b16 %v500
        %v990 = vunpack.c.h.b16 %v500
        %v991 = vunpack.c.l.b16 %v501
        %v992 = vunpack.c.h.b16 %v501
        %v993 = vunpack.c.l.b16 %v502
        %v994 = vunpack.c.h.b16 %v502
        %v995 = vunpack.c.l.b16 %v503
        %v996 = vunpack.c.h.b16 %v503
        %v997 = vunpack.c.l.b16 %v504
        %v998 = vunpack.c.h.b16 %v504
        %v999 = vunpack.c.l.b16 %v505
        %v1000 = vunpack.c.h.b16 %v505
        %v1001 = vunpack.c.l.b16 %v506
        %v1002 = vunpack.c.h.b16 %v506
        %v1003 = vunpack.c.l.b16 %v507
        %v1004 = vunpack.c.h.b16 %v507
        %v1005 = vunpack.c.l.b16 %v508
        %v1006 = vunpack.c.h.b16 %v508
        %v1007 = vunpack.c.l.b16 %v509
        %v1008 = vunpack.c.h.b16 %v509
        %v1009 = vunpack.c.l.b16 %v510
        %v1010 = vunpack.c.h.b16 %v510
        %v1011 = vunpack.c.l.b16 %v511
        %v1012 = vunpack.c.h.b16 %v511
        %v1013 = vunpack.c.l.b16 %v512
        %v1014 = vunpack.c.h.b16 %v512
        %v1015 = vunpack.c.l.b16 %v513
        %v1016 = vunpack.c.h.b16 %v513
        %v1017 = vunpack.c.l.b16 %v514
        %v1018 = vunpack.c.h.b16 %v514
        %v1019 = vunpack.c.l.b16 %v515
        %v1020 = vunpack.c.h.b16 %v515
        %v1021 = vunpack.c.l.b16 %v516
        %v1022 = vunpack.c.h.b16 %v516
        %v1023 = vunpack.c.l.b16 %v517
        %v1024 = vunpack.c.h.b16 %v517
        %v1025 = vunpack.c.l.b16 %v518
        %v1026 = vunpack.c.h.b16 %v518
        %v1027 = vunpack.c.l.b16 %v519
        %v1028 = vunpack.c.h.b16 %v519
        %v1029 = vunpack.c.l.b16 %v520
        %v1030 = vunpack.c.h.b16 %v520
        %v1031 = vunpack.c.l.b16 %v521
        %v1032 = vunpack.c.h.b16 %v521
        %v1033 = vunpack.c.l.b16 %v522
        %v1034 = vunpack.c.h.b16 %v522
        %v1035 = vunpack.c.l.b16 %v523
        %v1036 = vunpack.c.h.b16 %v523
        %v1037 = vunpack.c.l.b16 %v524
        %v1038 = vunpack.c.h.b16 %v524
        %v1039 = vunpack.c.l.b16 %v525
        %v1040 = vunpack.c.h.b16 %v525
        %v1041 = vunpack.c.l.b16 %v526
        %v1042 = vunpack.c.h.b16 %v526
        %v1043 = vunpack.c.l.b16 %v527
        %v1044 = vunpack.c.h.b16 %v527
        %v1045 = vunpack.c.l.b16 %v528
        %v1046 = vunpack.c.h.b16 %v528
        %v1047 = vunpack.c.l.b16 %v529
        %v1048 = vunpack.c.h.b16 %v529
        %v1049 = vunpack.c.l.b16 %v530
        %v1050 = vunpack.c.h.b16 %v530
        %v1051 = vunpack.c.l.b16 %v531
        %v1052 = vunpack.c.h.b16 %v531
        %v1053 = vunpack.c.l.b16 %v532
        %v1054 = vunpack.c.h.b16 %v532
        %v1055 = vunpack.c.l.b16 %v533
        %v1056 = vunpack.c.h.b16 %v533
        %v1057 = vunpack.c.l.b16 %v534
        %v1058 = vunpack.c.h.b16 %v534
        %v1059 = vunpack.c.l.b16 %v535
        %v1060 = vunpack.c.h.b16 %v535
        %v1061 = vunpack.c.l.b16 %v536
        %v1062 = vunpack.c.h.b16 %v536
        %v1063 = vunpack.c.l.b16 %v537
        %v1064 = vunpack.c.h.b16 %v537
        %v1065 = vunpack.c.l.b16 %v538
        %v1066 = vunpack.c.h.b16 %v538
        %v1067 = vunpack.c.l.b16 %v539
        %v1068 = vunpack.c.h.b16 %v539
        %v1069 = vunpack.c.l.b16 %v540
        %v1070 = vunpack.c.h.b16 %v540
        %v1071 = vunpack.c.l.b16 %v541
        %v1072 = vunpack.c.h.b16 %v541
        %v1073 = vunpack.c.l.b16 %v542
        %v1074 = vunpack.c.h.b16 %v542
        %v1075 = vunpack.c.l.b16 %v543
        %v1076 = vunpack.c.h.b16 %v543
        %v1077 = vunpack.c.l.b16 %v544
        %v1078 = vunpack.c.h.b16 %v544
        %v1079 = vunpack.c.l.b16 %v545
        %v1080 = vunpack.c.h.b16 %v545
        %v1081 = vunpack.c.l.b16 %v546
        %v1082 = vunpack.c.h.b16 %v546
        %v1083 = vunpack.c.l.b16 %v547
        %v1084 = vunpack.c.h.b16 %v547
        %v1085 = vunpack.c.l.b16 %v548
        %v1086 = vunpack.c.h.b16 %v548
        %v1087 = vunpack.c.l.b16 %v549
        %v1088 = vunpack.c.h.b16 %v549
        %v1089 = vunpack.c.l.b16 %v550
        %v1090 = vunpack.c.h.b16 %v550
        %v1091 = vunpack.c.l.b16 %v551
        %v1092 = vunpack.c.h.b16 %v551
        %v1093 = vunpack.c.l.b16 %v552
        %v1094 = vunpack.c.h.b16 %v552
        %v1095 = vunpack.c.l.b16 %v553
        %v1096 = vunpack.c.h.b16 %v553
        %v1097 = vunpack.c.l.b16 %v554
        %v1098 = vunpack.c.h.b16 %v554
        %v1099 = vunpack.c.l.b16 %v555
        %v1100 = vunpack.c.h.b16 %v555
        %v1101 = vunpack.c.l.b16 %v556
        %v1102 = vunpack.c.h.b16 %v556
        %v1103 = vunpack.c.l.b16 %v557
        %v1104 = vunpack.c.h.b16 %v557
        %v1105 = vunpack.c.l.b16 %v558
        %v1106 = vunpack.c.h.b16 %v558
        %v1107 = vunpack.c.l.b16 %v559
        %v1108 = vunpack.c.h.b16 %v559
        %v1109 = vunpack.c.l.b16 %v560
        %v1110 = vunpack.c.h.b16 %v560
        %v1111 = vunpack.c.l.b16 %v561
        %v1112 = vunpack.c.h.b16 %v561
        %v1113 = vunpack.c.l.b16 %v562
        %v1114 = vunpack.c.h.b16 %v562
        %v1115 = vunpack.c.l.b16 %v563
        %v1116 = vunpack.c.h.b16 %v563
        %v1117 = vunpack.c.l.b16 %v564
        %v1118 = vunpack.c.h.b16 %v564
        %v1119 = vunpack.c.l.b16 %v565
        %v1120 = vunpack.c.h.b16 %v565
        %v1121 = vunpack.c.l.b16 %v566
        %v1122 = vunpack.c.h.b16 %v566
        %v1123 = vunpack.c.l.b16 %v567
        %v1124 = vunpack.c.h.b16 %v567
        %v1125 = vunpack.c.l.b16 %v568
        %v1126 = vunpack.c.h.b16 %v568
        %v1127 = vunpack.c.l.b16 %v569
        %v1128 = vunpack.c.h.b16 %v569
        %v1129 = vunpack.c.l.b16 %v570
        %v1130 = vunpack.c.h.b16 %v570
        %v1131 = vunpack.c.l.b16 %v571
        %v1132 = vunpack.c.h.b16 %v571
        %v1133 = vunpack.c.l.b16 %v572
        %v1134 = vunpack.c.h.b16 %v572
        %v1135 = vunpack.c.l.b16 %v573
        %v1136 = vunpack.c.h.b16 %v573
        %v1137 = vunpack.c.l.b16 %v574
        %v1138 = vunpack.c.h.b16 %v574
        %v1139 = vunpack.c.l.b16 %v575
        %v1140 = vunpack.c.h.b16 %v575
        %v1141 = vunpack.c.l.b16 %v576
        %v1142 = vunpack.c.h.b16 %v576
        %v1143 = vunpack.c.l.b16 %v577
        %v1144 = vunpack.c.h.b16 %v577
        %v1145 = vunpack.c.l.b16 %v578
        %v1146 = vunpack.c.h.b16 %v578
        %v1147 = vunpack.c.l.b16 %v579
        %v1148 = vunpack.c.h.b16 %v579
        %v1149 = vunpack.c.l.b16 %v580
        %v1150 = vunpack.c.h.b16 %v580
        %v1151 = vunpack.c.l.b16 %v581
        %v1152 = vunpack.c.h.b16 %v581
        %v1153 = vunpack.c.l.b16 %v582
        %v1154 = vunpack.c.h.b16 %v582
        %v1155 = vunpack.c.l.b16 %v583
        %v1156 = vunpack.c.h.b16 %v583
        %v1157 = vunpack.c.l.b16 %v584
        %v1158 = vunpack.c.h.b16 %v584
        %v1159 = vunpack.c.l.b16 %v585
        %v1160 = vunpack.c.h.b16 %v585
        %v1161 = vunpack.c.l.b16 %v586
        %v1162 = vunpack.c.h.b16 %v586
        %v1163 = vunpack.c.l.b16 %v587
        %v1164 = vunpack.c.h.b16 %v587
        %v1165 = vunpack.c.l.b16 %v588
        %v1166 = vunpack.c.h.b16 %v588
        %v1167 = vunpack.c.l.b16 %v589
        %v1168 = vunpack.c.h.b16 %v589
        %v1169 = vunpack.c.l.b16 %v590
        %v1170 = vunpack.c.h.b16 %v590
        %v1171 = vunpack.c.l.b16 %v591
        %v1172 = vunpack.c.h.b16 %v591
        %v1173 = vunpack.c.l.b16 %v592
        %v1174 = vunpack.c.h.b16 %v592
        %v1175 = vunpack.c.l.b16 %v593
        %v1176 = vunpack.c.h.b16 %v593
        %v1177 = vunpack.c.l.b16 %v594
        %v1178 = vunpack.c.h.b16 %v594
        %v1179 = vunpack.c.l.b16 %v595
        %v1180 = vunpack.c.h.b16 %v595
        %v1181 = vunpack.c.l.b16 %v596
        %v1182 = vunpack.c.h.b16 %v596
        %v1183 = vunpack.c.l.b16 %v597
        %v1184 = vunpack.c.h.b16 %v597
        %v1185 = vunpack.c.l.b16 %v598
        %v1186 = vunpack.c.h.b16 %v598
        %v1187 = vpack.c.b16 %v805, %v803
        %v1188 = vpack.c.b16 %v806, %v804
        %v1189 = vpack.c.b16 %v809, %v807
        %v1190 = vpack.c.b16 %v810, %v808
        %v1191 = vpack.c.b16 %v813, %v811
        %v1192 = vpack.c.b16 %v814, %v812
        %v1193 = vpack.c.b16 %v817, %v815
        %v1194 = vpack.c.b16 %v818, %v816
        %v1195 = vpack.c.b16 %v821, %v819
        %v1196 = vpack.c.b16 %v822, %v820
        %v1197 = vpack.c.b16 %v825, %v823
        %v1198 = vpack.c.b16 %v826, %v824
        %v1199 = vpack.c.b16 %v829, %v827
        %v1200 = vpack.c.b16 %v830, %v828
        %v1201 = vpack.c.b16 %v833, %v831
        %v1202 = vpack.c.b16 %v834, %v832
        %v1203 = vpack.c.b16 %v837, %v835
        %v1204 = vpack.c.b16 %v838, %v836
        %v1205 = vpack.c.b16 %v841, %v839
        %v1206 = vpack.c.b16 %v842, %v840
        %v1207 = vpack.c.b16 %v845, %v843
        %v1208 = vpack.c.b16 %v846, %v844
        %v1209 = vpack.c.b16 %v849, %v847
        %v1210 = vpack.c.b16 %v850, %v848
        %v1211 = vpack.c.b16 %v853, %v851
        %v1212 = vpack.c.b16 %v854, %v852
        %v1213 = vpack.c.b16 %v857, %v855
        %v1214 = vpack.c.b16 %v858, %v856
        %v1215 = vpack.c.b16 %v861, %v859
        %v1216 = vpack.c.b16 %v862, %v860
        %v1217 = vpack.c.b16 %v865, %v863
        %v1218 = vpack.c.b16 %v866, %v864
        %v1219 = vpack.c.b16 %v869, %v867
        %v1220 = vpack.c.b16 %v870, %v868
        %v1221 = vpack.c.b16 %v873, %v871
        %v1222 = vpack.c.b16 %v874, %v872
        %v1223 = vpack.c.b16 %v877, %v875
        %v1224 = vpack.c.b16 %v878, %v876
        %v1225 = vpack.c.b16 %v881, %v879
        %v1226 = vpack.c.b16 %v882, %v880
        %v1227 = vpack.c.b16 %v885, %v883
        %v1228 = vpack.c.b16 %v886, %v884
        %v1229 = vpack.c.b16 %v889, %v887
        %v1230 = vpack.c.b16 %v890, %v888
        %v1231 = vpack.c.b16 %v893, %v891
        %v1232 = vpack.c.b16 %v894, %v892
        %v1233 = vpack.c.b16 %v897, %v895
        %v1234 = vpack.c.b16 %v898, %v896
        %v1235 = vpack.c.b16 %v901, %v899
        %v1236 = vpack.c.b16 %v902, %v900
        %v1237 = vpack.c.b16 %v905, %v903
        %v1238 = vpack.c.b16 %v906, %v904
        %v1239 = vpack.c.b16 %v909, %v907
        %v1240 = vpack.c.b16 %v910, %v908
        %v1241 = vpack.c.b16 %v913, %v911
        %v1242 = vpack.c.b16 %v914, %v912
        %v1243 = vpack.c.b16 %v917, %v915
        %v1244 = vpack.c.b16 %v918, %v916
        %v1245 = vpack.c.b16 %v921, %v919
        %v1246 = vpack.c.b16 %v922, %v920
        %v1247 = vpack.c.b16 %v925, %v923
        %v1248 = vpack.c.b16 %v926, %v924
        %v1249 = vpack.c.b16 %v929, %v927
        %v1250 = vpack.c.b16 %v930, %v928
        %v1251 = vpack.c.b16 %v933, %v931
        %v1252 = vpack.c.b16 %v934, %v932
        %v1253 = vpack.c.b16 %v937, %v935
        %v1254 = vpack.c.b16 %v938, %v936
        %v1255 = vpack.c.b16 %v941, %v939
        %v1256 = vpack.c.b16 %v942, %v940
        %v1257 = vpack.c.b16 %v945, %v943
        %v1258 = vpack.c.b16 %v946, %v944
        %v1259 = vpack.c.b16 %v949, %v947
        %v1260 = vpack.c.b16 %v950, %v948
        %v1261 = vpack.c.b16 %v953, %v951
        %v1262 = vpack.c.b16 %v954, %v952
        %v1263 = vpack.c.b16 %v957, %v955
        %v1264 = vpack.c.b16 %v958, %v956
        %v1265 = vpack.c.b16 %v961, %v959
        %v1266 = vpack.c.b16 %v962, %v960
        %v1267 = vpack.c.b16 %v965, %v963
        %v1268 = vpack.c.b16 %v966, %v964
        %v1269 = vpack.c.b16 %v969, %v967
        %v1270 = vpack.c.b16 %v970, %v968
        %v1271 = vpack.c.b16 %v973, %v971
        %v1272 = vpack.c.b16 %v974, %v972
        %v1273 = vpack.c.b16 %v977, %v975
        %v1274 = vpack.c.b16 %v978, %v976
        %v1275 = vpack.c.b16 %v981, %v979
        %v1276 = vpack.c.b16 %v982, %v980
        %v1277 = vpack.c.b16 %v985, %v983
        %v1278 = vpack.c.b16 %v986, %v984
        %v1279 = vpack.c.b16 %v989, %v987
        %v1280 = vpack.c.b16 %v990, %v988
        %v1281 = vpack.c.b16 %v993, %v991
        %v1282 = vpack.c.b16 %v994, %v992
        %v1283 = vpack.c.b16 %v997, %v995
        %v1284 = vpack.c.b16 %v998, %v996
        %v1285 = vpack.c.b16 %v1001, %v999
        %v1286 = vpack.c.b16 %v1002, %v1000
        %v1287 = vpack.c.b16 %v1005, %v1003
        %v1288 = vpack.c.b16 %v1006, %v1004
        %v1289 = vpack.c.b16 %v1009, %v1007
        %v1290 = vpack.c.b16 %v1010, %v1008
        %v1291 = vpack.c.b16 %v1013, %v1011
        %v1292 = vpack.c.b16 %v1014, %v1012
        %v1293 = vpack.c.b16 %v1017, %v1015
        %v1294 = vpack.c.b16 %v1018, %v1016
        %v1295 = vpack.c.b16 %v1021, %v1019
        %v1296 = vpack.c.b16 %v1022, %v1020
        %v1297 = vpack.c.b16 %v1025, %v1023
        %v1298 = vpack.c.b16 %v1026, %v1024
        %v1299 = vpack.c.b16 %v1029, %v1027
        %v1300 = vpack.c.b16 %v1030, %v1028
        %v1301 = vpack.c.b16 %v1033, %v1031
        %v1302 = vpack.c.b16 %v1034, %v1032
        %v1303 = vpack.c.b16 %v1037, %v1035
        %v1304 = vpack.c.b16 %v1038, %v1036
        %v1305 = vpack.c.b16 %v1041, %v1039
        %v1306 = vpack.c.b16 %v1042, %v1040
        %v1307 = vpack.c.b16 %v1045, %v1043
        %v1308 = vpack.c.b16 %v1046, %v1044
        %v1309 = vpack.c.b16 %v1049, %v1047
        %v1310 = vpack.c.b16 %v1050, %v1048
        %v1311 = vpack.c.b16 %v1053, %v1051
        %v1312 = vpack.c.b16 %v1054, %v1052
        %v1313 = vpack.c.b16 %v1057, %v1055
        %v1314 = vpack.c.b16 %v1058, %v1056
        %v1315 = vpack.c.b16 %v1061, %v1059
        %v1316 = vpack.c.b16 %v1062, %v1060
        %v1317 = vpack.c.b16 %v1065, %v1063
        %v1318 = vpack.c.b16 %v1066, %v1064
        %v1319 = vpack.c.b16 %v1069, %v1067
        %v1320 = vpack.c.b16 %v1070, %v1068
        %v1321 = vpack.c.b16 %v1073, %v1071
        %v1322 = vpack.c.b16 %v1074, %v1072
        %v1323 = vpack.c.b16 %v1077, %v1075
        %v1324 = vpack.c.b16 %v1078, %v1076
        %v1325 = vpack.c.b16 %v1081, %v1079
        %v1326 = vpack.c.b16 %v1082, %v1080
        %v1327 = vpack.c.b16 %v1085, %v1083
        %v1328 = vpack.c.b16 %v1086, %v1084
        %v1329 = vpack.c.b16 %v1089, %v1087
        %v1330 = vpack.c.b16 %v1090, %v1088
        %v1331 = vpack.c.b16 %v1093, %v1091
        %v1332 = vpack.c.b16 %v1094, %v1092
        %v1333 = vpack.c.b16 %v1097, %v1095
        %v1334 = vpack.c.b16 %v1098, %v1096
        %v1335 = vpack.c.b16 %v1101, %v1099
        %v1336 = vpack.c.b16 %v1102, %v1100
        %v1337 = vpack.c.b16 %v1105, %v1103
        %v1338 = vpack.c.b16 %v1106, %v1104
        %v1339 = vpack.c.b16 %v1109, %v1107
        %v1340 = vpack.c.b16 %v1110, %v1108
        %v1341 = vpack.c.b16 %v1113, %v1111
        %v1342 = vpack.c.b16 %v1114, %v1112
        %v1343 = vpack.c.b16 %v1117, %v1115
        %v1344 = vpack.c.b16 %v1118, %v1116
        %v1345 = vpack.c.b16 %v1121, %v1119
        %v1346 = vpack.c.b16 %v1122, %v1120
        %v1347 = vpack.c.b16 %v1125, %v1123
        %v1348 = vpack.c.b16 %v1126, %v1124
        %v1349 = vpack.c.b16 %v1129, %v1127
        %v1350 = vpack.c.b16 %v1130, %v1128
        %v1351 = vpack.c.b16 %v1133, %v1131
        %v1352 = vpack.c.b16 %v1134, %v1132
        %v1353 = vpack.c.b16 %v1137, %v1135
        %v1354 = vpack.c.b16 %v1138, %v1136
        %v1355 = vpack.c.b16 %v1141, %v1139
        %v1356 = vpack.c.b16 %v1142, %v1140
        %v1357 = vpack.c.b16 %v1145, %v1143
        %v1358 = vpack.c.b16 %v1146, %v1144
        %v1359 = vpack.c.b16 %v1149, %v1147
        %v1360 = vpack.c.b16 %v1150, %v1148
        %v1361 = vpack.c.b16 %v1153, %v1151
        %v1362 = vpack.c.b16 %v1154, %v1152
        %v1363 = vpack.c.b16 %v1157, %v1155
        %v1364 = vpack.c.b16 %v1158, %v1156
        %v1365 = vpack.c.b16 %v1161, %v1159
        %v1366 = vpack.c.b16 %v1162, %v1160
        %v1367 = vpack.c.b16 %v1165, %v1163
        %v1368 = vpack.c.b16 %v1166, %v1164
        %v1369 = vpack.c.b16 %v1169, %v1167
        %v1370 = vpack.c.b16 %v1170, %v1168
        %v1371 = vpack.c.b16 %v1173, %v1171
        %v1372 = vpack.c.b16 %v1174, %v1172
        %v1373 = vpack.c.b16 %v1177, %v1175
        %v1374 = vpack.c.b16 %v1178, %v1176
        %v1375 = vpack.c.b16 %v1181, %v1179
        %v1376 = vpack.c.b16 %v1182, %v1180
        %v1377 = vpack.c.b16 %v1185, %v1183
        %v1378 = vpack.c.b16 %v1186, %v1184
        %1571 = vmatprep.subr.bf16.mxu0 %v1188
        %1572 = vmatpush1.bf16.msra.mxu0 %v1187
        %1573 = vmatprep.subr.bf16.mxu0 %v1190
        %1574 = vmatpush1.bf16.msra.mxu0 %v1189
        %1575 = vmatprep.subr.bf16.mxu0 %v1192
        %1576 = vmatpush1.bf16.msra.mxu0 %v1191
        %1577 = vmatprep.subr.bf16.mxu0 %v1194
        %1578 = vmatpush1.bf16.msra.mxu0 %v1193
        %1579 = vmatprep.subr.bf16.mxu0 %v1196
        %1580 = vmatpush1.bf16.msra.mxu0 %v1195
        %1581 = vmatprep.subr.bf16.mxu0 %v1198
        %1582 = vmatpush1.bf16.msra.mxu0 %v1197
        %1583 = vmatprep.subr.bf16.mxu0 %v1200
        %1584 = vmatpush1.bf16.msra.mxu0 %v1199
        %1585 = vmatprep.subr.bf16.mxu0 %v1202
        %1586 = vmatpush1.bf16.msra.mxu0 %v1201
        %1587 = vmatprep.subr.bf16.mxu0 %v1204
        %1588 = vmatpush1.bf16.msra.mxu0 %v1203
        %1589 = vmatprep.subr.bf16.mxu0 %v1206
        %1590 = vmatpush1.bf16.msra.mxu0 %v1205
        %1591 = vmatprep.subr.bf16.mxu0 %v1208
        %1592 = vmatpush1.bf16.msra.mxu0 %v1207
        %1593 = vmatprep.subr.bf16.mxu0 %v1210
        %1594 = vmatpush1.bf16.msra.mxu0 %v1209
        %1595 = vmatprep.subr.bf16.mxu0 %v1212
        %1596 = vmatpush1.bf16.msra.mxu0 %v1211
        %1597 = vmatprep.subr.bf16.mxu0 %v1214
        %1598 = vmatpush1.bf16.msra.mxu0 %v1213
        %1599 = vmatprep.subr.bf16.mxu0 %v1216
        %1600 = vmatpush1.bf16.msra.mxu0 %v1215
        %1601 = vmatprep.subr.bf16.mxu0 %v1218
        %1602 = vmatpush1.bf16.msra.mxu0 %v1217
        %1603 = vmatprep.mubr.bf16.mxu0 %v396
        %1604 = vmatmul.mubr.bf16.gmra.mrb[0].mxu0 %v395
        %v1605 = vpop.f32.mrb[0].mxu0
        %v1606 = vadd.f32 %v604, %v1605
        %v1607 = vpop.f32.mrb[0].mxu0
        %v1608 = vadd.f32 %v608, %v1607
        %v1609 = vpop.f32.mrb[0].mxu0
        %v1610 = vadd.f32 %v604, %v1609
        %v1611 = vpop.f32.mrb[0].mxu0
        %v1612 = vadd.f32 %v608, %v1611
        %1613 = vdwg.mxu0
        %1614 = vmatprep.subr.bf16.mxu0 %v1220
        %1615 = vmatpush1.bf16.msra.mxu0 %v1219
        %1616 = vmatprep.subr.bf16.mxu0 %v1222
        %1617 = vmatpush1.bf16.msra.mxu0 %v1221
        %1618 = vmatprep.subr.bf16.mxu0 %v1224
        %1619 = vmatpush1.bf16.msra.mxu0 %v1223
        %1620 = vmatprep.subr.bf16.mxu0 %v1226
        %1621 = vmatpush1.bf16.msra.mxu0 %v1225
        %1622 = vmatprep.subr.bf16.mxu0 %v1228
        %1623 = vmatpush1.bf16.msra.mxu0 %v1227
        %1624 = vmatprep.subr.bf16.mxu0 %v1230
        %1625 = vmatpush1.bf16.msra.mxu0 %v1229
        %1626 = vmatprep.subr.bf16.mxu0 %v1232
        %1627 = vmatpush1.bf16.msra.mxu0 %v1231
        %1628 = vmatprep.subr.bf16.mxu0 %v1234
        %1629 = vmatpush1.bf16.msra.mxu0 %v1233
        %1630 = vmatprep.subr.bf16.mxu0 %v1236
        %1631 = vmatpush1.bf16.msra.mxu0 %v1235
        %1632 = vmatprep.subr.bf16.mxu0 %v1238
        %1633 = vmatpush1.bf16.msra.mxu0 %v1237
        %1634 = vmatprep.subr.bf16.mxu0 %v1240
        %1635 = vmatpush1.bf16.msra.mxu0 %v1239
        %1636 = vmatprep.subr.bf16.mxu0 %v1242
        %1637 = vmatpush1.bf16.msra.mxu0 %v1241
        %1638 = vmatprep.subr.bf16.mxu0 %v1244
        %1639 = vmatpush1.bf16.msra.mxu0 %v1243
        %1640 = vmatprep.subr.bf16.mxu0 %v1246
        %1641 = vmatpush1.bf16.msra.mxu0 %v1245
        %1642 = vmatprep.subr.bf16.mxu0 %v1248
        %1643 = vmatpush1.bf16.msra.mxu0 %v1247
        %1644 = vmatprep.subr.bf16.mxu0 %v1250
        %1645 = vmatpush1.bf16.msra.mxu0 %v1249
        %1646 = vmatprep.mubr.bf16.mxu0 %v398
        %1647 = vmatmul.mubr.bf16.gmra.mrb[0].mxu0 %v397
        %v1648 = vpop.f32.mrb[0].mxu0
        %v1649 = vadd.f32 %v1606, %v1648
        %v1650 = vpop.f32.mrb[0].mxu0
        %v1651 = vadd.f32 %v1608, %v1650
        %v1652 = vpop.f32.mrb[0].mxu0
        %v1653 = vadd.f32 %v1610, %v1652
        %v1654 = vpop.f32.mrb[0].mxu0
        %v1655 = vadd.f32 %v1612, %v1654
        %1656 = vdwg.mxu0
        %1657 = vmatprep.subr.bf16.mxu0 %v1252
        %1658 = vmatpush1.bf16.msra.mxu0 %v1251
        %1659 = vmatprep.subr.bf16.mxu0 %v1254
        %1660 = vmatpush1.bf16.msra.mxu0 %v1253
        %1661 = vmatprep.subr.bf16.mxu0 %v1256
        %1662 = vmatpush1.bf16.msra.mxu0 %v1255
        %1663 = vmatprep.subr.bf16.mxu0 %v1258
        %1664 = vmatpush1.bf16.msra.mxu0 %v1257
        %1665 = vmatprep.subr.bf16.mxu0 %v1260
        %1666 = vmatpush1.bf16.msra.mxu0 %v1259
        %1667 = vmatprep.subr.bf16.mxu0 %v1262
        %1668 = vmatpush1.bf16.msra.mxu0 %v1261
        %1669 = vmatprep.subr.bf16.mxu0 %v1264
        %1670 = vmatpush1.bf16.msra.mxu0 %v1263
        %1671 = vmatprep.subr.bf16.mxu0 %v1266
        %1672 = vmatpush1.bf16.msra.mxu0 %v1265
        %1673 = vmatprep.subr.bf16.mxu0 %v1268
        %1674 = vmatpush1.bf16.msra.mxu0 %v1267
        %1675 = vmatprep.subr.bf16.mxu0 %v1270
        %1676 = vmatpush1.bf16.msra.mxu0 %v1269
        %1677 = vmatprep.subr.bf16.mxu0 %v1272
        %1678 = vmatpush1.bf16.msra.mxu0 %v1271
        %1679 = vmatprep.subr.bf16.mxu0 %v1274
        %1680 = vmatpush1.bf16.msra.mxu0 %v1273
        %1681 = vmatprep.subr.bf16.mxu0 %v1276
        %1682 = vmatpush1.bf16.msra.mxu0 %v1275
        %1683 = vmatprep.subr.bf16.mxu0 %v1278
        %1684 = vmatpush1.bf16.msra.mxu0 %v1277
        %1685 = vmatprep.subr.bf16.mxu0 %v1280
        %1686 = vmatpush1.bf16.msra.mxu0 %v1279
        %1687 = vmatprep.subr.bf16.mxu0 %v1282
        %1688 = vmatpush1.bf16.msra.mxu0 %v1281
        %1689 = vmatprep.mubr.bf16.mxu0 %v400
        %1690 = vmatmul.mubr.bf16.gmra.mrb[0].mxu0 %v399
        %v1691 = vpop.f32.mrb[0].mxu0
        %v1692 = vadd.f32 %v1649, %v1691
        %v1693 = vpop.f32.mrb[0].mxu0
        %v1694 = vadd.f32 %v1651, %v1693
        %v1695 = vpop.f32.mrb[0].mxu0
        %v1696 = vadd.f32 %v1653, %v1695
        %v1697 = vpop.f32.mrb[0].mxu0
        %v1698 = vadd.f32 %v1655, %v1697
        %1699 = vdwg.mxu0
        %1700 = vmatprep.subr.bf16.mxu0 %v1284
        %1701 = vmatpush1.bf16.msra.mxu0 %v1283
        %1702 = vmatprep.subr.bf16.mxu0 %v1286
        %1703 = vmatpush1.bf16.msra.mxu0 %v1285
        %1704 = vmatprep.subr.bf16.mxu0 %v1288
        %1705 = vmatpush1.bf16.msra.mxu0 %v1287
        %1706 = vmatprep.subr.bf16.mxu0 %v1290
        %1707 = vmatpush1.bf16.msra.mxu0 %v1289
        %1708 = vmatprep.subr.bf16.mxu0 %v1292
        %1709 = vmatpush1.bf16.msra.mxu0 %v1291
        %1710 = vmatprep.subr.bf16.mxu0 %v1294
        %1711 = vmatpush1.bf16.msra.mxu0 %v1293
        %1712 = vmatprep.subr.bf16.mxu0 %v1296
        %1713 = vmatpush1.bf16.msra.mxu0 %v1295
        %1714 = vmatprep.subr.bf16.mxu0 %v1298
        %1715 = vmatpush1.bf16.msra.mxu0 %v1297
        %1716 = vmatprep.subr.bf16.mxu0 %v1300
        %1717 = vmatpush1.bf16.msra.mxu0 %v1299
        %1718 = vmatprep.subr.bf16.mxu0 %v1302
        %1719 = vmatpush1.bf16.msra.mxu0 %v1301
        %1720 = vmatprep.subr.bf16.mxu0 %v1304
        %1721 = vmatpush1.bf16.msra.mxu0 %v1303
        %1722 = vmatprep.subr.bf16.mxu0 %v1306
        %1723 = vmatpush1.bf16.msra.mxu0 %v1305
        %1724 = vmatprep.subr.bf16.mxu0 %v1308
        %1725 = vmatpush1.bf16.msra.mxu0 %v1307
        %1726 = vmatprep.subr.bf16.mxu0 %v1310
        %1727 = vmatpush1.bf16.msra.mxu0 %v1309
        %1728 = vmatprep.subr.bf16.mxu0 %v1312
        %1729 = vmatpush1.bf16.msra.mxu0 %v1311
        %1730 = vmatprep.subr.bf16.mxu0 %v1314
        %1731 = vmatpush1.bf16.msra.mxu0 %v1313
        %1732 = vmatprep.mubr.bf16.mxu0 %v402
        %1733 = vmatmul.mubr.bf16.gmra.mrb[0].mxu0 %v401
        %v1734 = vpop.f32.mrb[0].mxu0
        %v1735 = vadd.f32 %v1692, %v1734
        %v1736 = vpop.f32.mrb[0].mxu0
        %v1737 = vadd.f32 %v1694, %v1736
        %v1738 = vpop.f32.mrb[0].mxu0
        %v1739 = vadd.f32 %v1696, %v1738
        %v1740 = vpop.f32.mrb[0].mxu0
        %v1741 = vadd.f32 %v1698, %v1740
        %1742 = vdwg.mxu0
        %1743 = vmatprep.subr.bf16.mxu0 %v1316
        %1744 = vmatpush1.bf16.msra.mxu0 %v1315
        %1745 = vmatprep.subr.bf16.mxu0 %v1318
        %1746 = vmatpush1.bf16.msra.mxu0 %v1317
        %1747 = vmatprep.subr.bf16.mxu0 %v1320
        %1748 = vmatpush1.bf16.msra.mxu0 %v1319
        %1749 = vmatprep.subr.bf16.mxu0 %v1322
        %1750 = vmatpush1.bf16.msra.mxu0 %v1321
        %1751 = vmatprep.subr.bf16.mxu0 %v1324
        %1752 = vmatpush1.bf16.msra.mxu0 %v1323
        %1753 = vmatprep.subr.bf16.mxu0 %v1326
        %1754 = vmatpush1.bf16.msra.mxu0 %v1325
        %1755 = vmatprep.subr.bf16.mxu0 %v1328
        %1756 = vmatpush1.bf16.msra.mxu0 %v1327
        %1757 = vmatprep.subr.bf16.mxu0 %v1330
        %1758 = vmatpush1.bf16.msra.mxu0 %v1329
        %1759 = vmatprep.subr.bf16.mxu0 %v1332
        %1760 = vmatpush1.bf16.msra.mxu0 %v1331
        %1761 = vmatprep.subr.bf16.mxu0 %v1334
        %1762 = vmatpush1.bf16.msra.mxu0 %v1333
        %1763 = vmatprep.subr.bf16.mxu0 %v1336
        %1764 = vmatpush1.bf16.msra.mxu0 %v1335
        %1765 = vmatprep.subr.bf16.mxu0 %v1338
        %1766 = vmatpush1.bf16.msra.mxu0 %v1337
        %1767 = vmatprep.subr.bf16.mxu0 %v1340
        %1768 = vmatpush1.bf16.msra.mxu0 %v1339
        %1769 = vmatprep.subr.bf16.mxu0 %v1342
        %1770 = vmatpush1.bf16.msra.mxu0 %v1341
        %1771 = vmatprep.subr.bf16.mxu0 %v1344
        %1772 = vmatpush1.bf16.msra.mxu0 %v1343
        %1773 = vmatprep.subr.bf16.mxu0 %v1346
        %1774 = vmatpush1.bf16.msra.mxu0 %v1345
        %1775 = vmatprep.mubr.bf16.mxu0 %v404
        %1776 = vmatmul.mubr.bf16.gmra.mrb[0].mxu0 %v403
        %v1777 = vpop.f32.mrb[0].mxu0
        %v1778 = vadd.f32 %v1735, %v1777
        %v1779 = vpop.f32.mrb[0].mxu0
        %v1780 = vadd.f32 %v1737, %v1779
        %v1781 = vpop.f32.mrb[0].mxu0
        %v1782 = vadd.f32 %v1739, %v1781
        %v1783 = vpop.f32.mrb[0].mxu0
        %v1784 = vadd.f32 %v1741, %v1783
        %1785 = vdwg.mxu0
        %1786 = vmatprep.subr.bf16.mxu0 %v1348
        %1787 = vmatpush1.bf16.msra.mxu0 %v1347
        %1788 = vmatprep.subr.bf16.mxu0 %v1350
        %1789 = vmatpush1.bf16.msra.mxu0 %v1349
        %1790 = vmatprep.subr.bf16.mxu0 %v1352
        %1791 = vmatpush1.bf16.msra.mxu0 %v1351
        %1792 = vmatprep.subr.bf16.mxu0 %v1354
        %1793 = vmatpush1.bf16.msra.mxu0 %v1353
        %1794 = vmatprep.subr.bf16.mxu0 %v1356
        %1795 = vmatpush1.bf16.msra.mxu0 %v1355
        %1796 = vmatprep.subr.bf16.mxu0 %v1358
        %1797 = vmatpush1.bf16.msra.mxu0 %v1357
        %1798 = vmatprep.subr.bf16.mxu0 %v1360
        %1799 = vmatpush1.bf16.msra.mxu0 %v1359
        %1800 = vmatprep.subr.bf16.mxu0 %v1362
        %1801 = vmatpush1.bf16.msra.mxu0 %v1361
        %1802 = vmatprep.subr.bf16.mxu0 %v1364
        %1803 = vmatpush1.bf16.msra.mxu0 %v1363
        %1804 = vmatprep.subr.bf16.mxu0 %v1366
        %1805 = vmatpush1.bf16.msra.mxu0 %v1365
        %1806 = vmatprep.subr.bf16.mxu0 %v1368
        %1807 = vmatpush1.bf16.msra.mxu0 %v1367
        %1808 = vmatprep.subr.bf16.mxu0 %v1370
        %1809 = vmatpush1.bf16.msra.mxu0 %v1369
        %1810 = vmatprep.subr.bf16.mxu0 %v1372
        %1811 = vmatpush1.bf16.msra.mxu0 %v1371
        %1812 = vmatprep.subr.bf16.mxu0 %v1374
        %1813 = vmatpush1.bf16.msra.mxu0 %v1373
        %1814 = vmatprep.subr.bf16.mxu0 %v1376
        %1815 = vmatpush1.bf16.msra.mxu0 %v1375
        %1816 = vmatprep.subr.bf16.mxu0 %v1378
        %1817 = vmatpush1.bf16.msra.mxu0 %v1377
        %1818 = vmatprep.mubr.bf16.mxu0 %v406
        %1819 = vmatmul.mubr.bf16.gmra.mrb[0].mxu0 %v405
        %v1820 = vpop.f32.mrb[0].mxu0
        %v1821 = vadd.f32 %v1778, %v1820
        %v1822 = vpop.f32.mrb[0].mxu0
        %v1823 = vadd.f32 %v1780, %v1822
        %v1824 = vpop.f32.mrb[0].mxu0
        %v1825 = vadd.f32 %v1782, %v1824
        %v1826 = vpop.f32.mrb[0].mxu0
        %v1827 = vadd.f32 %v1784, %v1826
        %1828 = vdwg.mxu0
        %v1829 = vmax.f32 %v1821, 0.0
        %v1830 = vmax.f32 %v1823, 0.0
        %v1831 = vmax.f32 %v1825, 0.0
        %v1832 = vmax.f32 %v1827, 0.0
        %v1833 = vld [vmem:[#allocation2] sm:$0xff]
        %v1834 = vld [vmem:[#allocation2 + $0x8] sm:$0xff]
        %v1835 = vpack.c.bf16 %v1831, %v1829
        %v1836 = vpack.c.bf16 %v1832, %v1830
        %v1837 = vld [vmem:[%s323] sm:$0xf]
        %v1838 = vld [vmem:[%s323 + $0x4] sm:$0xf]
        %v1839 = vld [vmem:[%s323 + $0x8] sm:$0xf]
        %v1840 = vld [vmem:[%s323 + $0xc] sm:$0xf]
        %v1841 = vld [vmem:[%s323 + $0x10] sm:$0xf]
        %v1842 = vld [vmem:[%s323 + $0x14] sm:$0xf]
        %v1843 = vld [vmem:[%s323 + $0x18] sm:$0xf]
        %v1844 = vld [vmem:[%s323 + $0x1c] sm:$0xf]
        %v1845 = vld [vmem:[%s323 + $0x20] sm:$0xf]
        %v1846 = vld [vmem:[%s323 + $0x24] sm:$0xf]
        %v1847 = vld [vmem:[%s323 + $0x28] sm:$0xf]
        %v1848 = vld [vmem:[%s323 + $0x2c] sm:$0xf]
        %v1849 = vld [vmem:[%s323 + $0x30] sm:$0xf]
        %v1850 = vld [vmem:[%s323 + $0x34] sm:$0xf]
        %v1851 = vld [vmem:[%s323 + $0x38] sm:$0xf]
        %v1852 = vld [vmem:[%s323 + $0x3c] sm:$0xf]
        %v1853 = vld [vmem:[%s323 + $0x40] sm:$0xf]
        %v1854 = vld [vmem:[%s323 + $0x44] sm:$0xf]
        %v1855 = vld [vmem:[%s323 + $0x48] sm:$0xf]
        %v1856 = vld [vmem:[%s323 + $0x4c] sm:$0xf]
        %v1857 = vld [vmem:[%s323 + $0x50] sm:$0xf]
        %v1858 = vld [vmem:[%s323 + $0x54] sm:$0xf]
        %v1859 = vld [vmem:[%s323 + $0x58] sm:$0xf]
        %v1860 = vld [vmem:[%s323 + $0x5c] sm:$0xf]
        %v1861 = vld [vmem:[%s323 + $0x60] sm:$0xf]
        %v1862 = vld [vmem:[%s323 + $0x64] sm:$0xf]
        %v1863 = vld [vmem:[%s323 + $0x68] sm:$0xf]
        %v1864 = vld [vmem:[%s323 + $0x6c] sm:$0xf]
        %v1865 = vld [vmem:[%s323 + $0x70] sm:$0xf]
        %v1866 = vld [vmem:[%s323 + $0x74] sm:$0xf]
        %v1867 = vld [vmem:[%s323 + $0x78] sm:$0xf]
        %v1868 = vld [vmem:[%s323 + $0x7c] sm:$0xf]
        %v1901 = vunpack.c.l.b16 %v1837
        %v1902 = vunpack.c.l.b16 %v1838
        %v1903 = vunpack.c.l.b16 %v1839
        %v1904 = vunpack.c.l.b16 %v1840
        %v1905 = vunpack.c.l.b16 %v1841
        %v1906 = vunpack.c.l.b16 %v1842
        %v1907 = vunpack.c.l.b16 %v1843
        %v1908 = vunpack.c.l.b16 %v1844
        %v1909 = vunpack.c.l.b16 %v1845
        %v1910 = vunpack.c.l.b16 %v1846
        %v1911 = vunpack.c.l.b16 %v1847
        %v1912 = vunpack.c.l.b16 %v1848
        %v1913 = vunpack.c.l.b16 %v1849
        %v1914 = vunpack.c.l.b16 %v1850
        %v1915 = vunpack.c.l.b16 %v1851
        %v1916 = vunpack.c.l.b16 %v1852
        %v1917 = vunpack.c.l.b16 %v1853
        %v1918 = vunpack.c.l.b16 %v1854
        %v1919 = vunpack.c.l.b16 %v1855
        %v1920 = vunpack.c.l.b16 %v1856
        %v1921 = vunpack.c.l.b16 %v1857
        %v1922 = vunpack.c.l.b16 %v1858
        %v1923 = vunpack.c.l.b16 %v1859
        %v1924 = vunpack.c.l.b16 %v1860
        %v1925 = vunpack.c.l.b16 %v1861
        %v1926 = vunpack.c.l.b16 %v1862
        %v1927 = vunpack.c.l.b16 %v1863
        %v1928 = vunpack.c.l.b16 %v1864
        %v1929 = vunpack.c.l.b16 %v1865
        %v1930 = vunpack.c.l.b16 %v1866
        %v1931 = vunpack.c.l.b16 %v1867
        %v1932 = vunpack.c.l.b16 %v1868
        %v1933 = vpack.c.b16 %v1902, %v1901
        %v1934 = vpack.c.b16 %v1904, %v1903
        %v1935 = vpack.c.b16 %v1906, %v1905
        %v1936 = vpack.c.b16 %v1908, %v1907
        %v1937 = vpack.c.b16 %v1910, %v1909
        %v1938 = vpack.c.b16 %v1912, %v1911
        %v1939 = vpack.c.b16 %v1914, %v1913
        %v1940 = vpack.c.b16 %v1916, %v1915
        %v1941 = vpack.c.b16 %v1918, %v1917
        %v1942 = vpack.c.b16 %v1920, %v1919
        %v1943 = vpack.c.b16 %v1922, %v1921
        %v1944 = vpack.c.b16 %v1924, %v1923
        %v1945 = vpack.c.b16 %v1926, %v1925
        %v1946 = vpack.c.b16 %v1928, %v1927
        %v1947 = vpack.c.b16 %v1930, %v1929
        %v1948 = vpack.c.b16 %v1932, %v1931
        %1965 = vmatprep.subr.bf16.mxu0 0
        %1966 = vmatpush1.bf16.msra.mxu0 %v1933
        %1967 = vmatprep.subr.bf16.mxu0 0
        %1968 = vmatpush1.bf16.msra.mxu0 %v1934
        %1969 = vmatprep.subr.bf16.mxu0 0
        %1970 = vmatpush1.bf16.msra.mxu0 %v1935
        %1971 = vmatprep.subr.bf16.mxu0 0
        %1972 = vmatpush1.bf16.msra.mxu0 %v1936
        %1973 = vmatprep.subr.bf16.mxu0 0
        %1974 = vmatpush1.bf16.msra.mxu0 %v1937
        %1975 = vmatprep.subr.bf16.mxu0 0
        %1976 = vmatpush1.bf16.msra.mxu0 %v1938
        %1977 = vmatprep.subr.bf16.mxu0 0
        %1978 = vmatpush1.bf16.msra.mxu0 %v1939
        %1979 = vmatprep.subr.bf16.mxu0 0
        %1980 = vmatpush1.bf16.msra.mxu0 %v1940
        %1981 = vmatprep.subr.bf16.mxu0 0
        %1982 = vmatpush1.bf16.msra.mxu0 %v1941
        %1983 = vmatprep.subr.bf16.mxu0 0
        %1984 = vmatpush1.bf16.msra.mxu0 %v1942
        %1985 = vmatprep.subr.bf16.mxu0 0
        %1986 = vmatpush1.bf16.msra.mxu0 %v1943
        %1987 = vmatprep.subr.bf16.mxu0 0
        %1988 = vmatpush1.bf16.msra.mxu0 %v1944
        %1989 = vmatprep.subr.bf16.mxu0 0
        %1990 = vmatpush1.bf16.msra.mxu0 %v1945
        %1991 = vmatprep.subr.bf16.mxu0 0
        %1992 = vmatpush1.bf16.msra.mxu0 %v1946
        %1993 = vmatprep.subr.bf16.mxu0 0
        %1994 = vmatpush1.bf16.msra.mxu0 %v1947
        %1995 = vmatprep.subr.bf16.mxu0 0
        %1996 = vmatpush1.bf16.msra.mxu0 %v1948
        %1997 = vmatprep.mubr.bf16.mxu0 %v1836
        %1998 = vmatmul.mubr.bf16.gmra.mrb[0].mxu0 %v1835
        %v1999 = vpop.f32.mrb[0].mxu0
        %v2000 = vadd.f32 0.0, %v1999
        %v2001 = vpop.f32.mrb[0].mxu0
        %v2002 = vpop.f32.mrb[0].mxu0
        %v2003 = vadd.f32 0.0, %v2002
        %v2004 = vpop.f32.mrb[0].mxu0
        %2005 = vdwg.mxu0
        %v2006 = vadd.f32 %v1833, %v2000
        %v2007 = vadd.f32 %v1834, %v2003
        %2008 = vst [vmem:[#allocation2] sm:$0xff] %v2006
        %2009 = vst [vmem:[#allocation2 + $0x8] sm:$0xff] %v2007
        %p2010 = scmp.eq.s32.totalorder %s29, 3
        // Predicated region
        $region65: #{descriptive_task_head.1} parent=39 // pred_check
          %p2011 = pneg %p2010
        $region66: #{descriptive_task_head.1} parent=39 // pred_check_branch
          %2013 = sbr.rel (%p2011) target = $region68
        $region67: #{descriptive_task_head.1} parent=39 // pred_region
          %v2014 = vld [vmem:[#allocation2] sm:$0xff]
          %v2015 = vld [vmem:[#allocation2 + $0x8] sm:$0xff]
          %v2016 = vld [vmem:[#allocation11] sm:$0x1]
          %v2018 = vlaneseq
          %v2019 = vshrl.u32 %v2018, 7
          %v2020 = vsub.s32 0, %v2019
          %v2021 = vrot.slane %v2016, %v2020
          %v2023 = vadd.f32 %v2014, %v2021
          %v2024 = vadd.f32 %v2015, %v2021
          %2025 = vst [vmem:[#allocation12] sm:$0xff] %v2023
          %2026 = vst [vmem:[#allocation12 + $0x8] sm:$0xff] %v2024
        $region68: #{descriptive_task_head.1} parent=39 // pred_fallthru
          _
        // Predicated region
        $region69: #{descriptive_task_head.1} parent=39 // pred_check
          %p2027 = pneg %p179
        $region70: #{descriptive_task_head.1} parent=39 // pred_check_branch
          %2029 = sbr.rel (%p2027) target = $region72
        $region71: #{descriptive_task_head.1} parent=39 // pred_region
          %s2030 = smul.u32 2, %s28
          %s2032 = ssub.s32 256, 256
          %2033 = vsyncadd [#allocation5], %s2032
          %s2034 = smul.addr %s2030, 128
          %s2035 = scalar_lea.hbm %s5, %s2034
          %s2036 = sshll.u32 [#allocation12], 4
          %s2037 = int_to_ptr.vmem [resolvable:$true] %s2036
          %2042 = dma.vmem_to_hbm [thread:$0]  %s2037, 256, %s2035, [#allocation5], 128, 128, 8
        $region72: #{descriptive_task_head.1} parent=39 // pred_fallthru
          _
        // Predicated region
        $region73: #{descriptive_task_head.1} parent=39 // pred_check
          %p2043 = pneg %p179
        $region74: #{descriptive_task_head.1} parent=39 // pred_check_branch
          %2045 = sbr.rel (%p2043) target = $region76
        $region75: #{descriptive_task_head.1} parent=39 // pred_region
          %2046 = dma.done [#allocation5], 256
        $region76: #{descriptive_task_head.1} parent=39 // pred_fallthru
          _
      $region40: #{descriptive_task_head.1} parent=5 // pred_fallthru
        _
      %p2047 = scmp.le.s32.totalorder 2, %s19
      // Predicated region
      $region77: #{descriptive_task_head.1} parent=5 // pred_check
        %p2048 = pneg %p2047
      $region78: #{descriptive_task_head.1} parent=5 // pred_check_branch
        %2050 = sbr.rel (%p2048) target = $region80
      $region79: #{descriptive_task_head.1} parent=5 // pred_region
        %s2051 = ssub.s32 %s19, 2
      $region80: #{descriptive_task_head.1} parent=5 // pred_fallthru
        _
    $region6: #{descriptive_task_head.1} parent=1 // loop_footer
      %s23 = sadd.s32 1, %s19
    $region7: #{descriptive_task_head.1} parent=1 // loop_footer_branch
      %18 = sbr.rel target = $region3
    $region8: #{descriptive_task_head.1} parent=1 // loop_exit
      _
    %2052 = vsyncpa [#allocation4], 1
    %s2053 = scalar_lea.sflag [#allocation4], 1
    %2054 = vsyncpa %s2053, 1
    %2055 = vsyncpa [#allocation7], 1
    %s2056 = scalar_lea.sflag [#allocation7], 1
    %2057 = vsyncpa %s2056, 1
    %2058 = vsyncpa [#allocation10], 1
    %s2059 = scalar_lea.sflag [#allocation10], 1
    %2060 = vsyncpa %s2059, 1
    %2061 = vsyncpa [#allocation5], 1
    %s2062 = scalar_lea.sflag [#allocation5], 1
    %2063 = vsyncpa %s2062, 1

</llo_original>
